<compile_context>
chip_gen: v7x
topology: tpu7x:2x2x1
jax: 0.10.0
libtpu: 0.0.40
codegen_flags: <defaults>
</compile_context>

<pallas_src>
import functools

import jax
import jax.numpy as jnp
from jax import lax
from jax.experimental import pallas as pl
from jax.experimental.pallas import tpu as pltpu


# ---------------------------------------------------------------------------
# Generation-aware VMEM budget: ~75% of physical, capped at 100 MiB
# (v5e/v6e: 128 MiB -> 96-100 MiB; v7x: 64 MiB -> ~48 MiB).
# ---------------------------------------------------------------------------
def _vmem_limit_bytes():
    try:
        cap = int(pltpu.get_tpu_info().vmem_capacity_bytes)
        return min(cap * 3 // 4, 100 * 1024 * 1024)
    except Exception:
        return 64 * 1024 * 1024


_VMEM_LIMIT = _vmem_limit_bytes()
_SMALL_VMEM = _VMEM_LIMIT <= 56 * 1024 * 1024        # v7x-class TensorCore


# ===========================================================================
# 1) Fused QKV projection:  x (M, DIM) -> q (M, H*D), kv (M, 2*H*D)
#    Weights resident in VMEM (constant index maps); grid over row tiles only
#    -> single streaming pass over x / q / kv, W read from HBM once.
# ===========================================================================
def _qkv_linear_kernel(x_ref, wq_ref, wkv_ref, q_ref, kv_ref):
    x = x_ref[...]
    q_ref[...] = jnp.dot(
        x, wq_ref[...], preferred_element_type=jnp.float32).astype(q_ref.dtype)
    kv_ref[...] = jnp.dot(
        x, wkv_ref[...], preferred_element_type=jnp.float32).astype(kv_ref.dtype)


def pallas_qkv_linear(x2d, w_q_t, w_kv_t, *, tm=None):
    M, K = x2d.shape
    HD = w_q_t.shape[1]
    HD2 = w_kv_t.shape[1]
    if tm is None:
        tm = 256 if _SMALL_VMEM else 512     # bigger row tiles on 128 MiB parts
    tm = min(tm, M)
    # TODO(synk): for very large DIM (>=4096, f32) add a K-reduction grid axis
    # or cast weights to bf16 so the resident W fits the v7x VMEM budget.
    return pl.pallas_call(
        _qkv_linear_kernel,
        out_shape=(jax.ShapeDtypeStruct((M, HD), x2d.dtype),
                   jax.ShapeDtypeStruct((M, HD2), x2d.dtype)),
        grid=(pl.cdiv(M, tm),),
        in_specs=[
            pl.BlockSpec((tm, K), lambda i: (i, 0)),    # streamed activations
            pl.BlockSpec((K, HD), lambda i: (0, 0)),    # resident W_q (scale folded)
            pl.BlockSpec((K, HD2), lambda i: (0, 0)),   # resident [W_k | W_v]
        ],
        out_specs=(
            pl.BlockSpec((tm, HD), lambda i: (i, 0)),
            pl.BlockSpec((tm, HD2), lambda i: (i, 0)),
        ),
        compiler_params=pltpu.CompilerParams(
            dimension_semantics=("parallel",),
            vmem_limit_bytes=_VMEM_LIMIT,
        ),
    )(x2d, w_q_t, w_kv_t)


# ===========================================================================
# 2) Linformer E-projection of K and V, fused in ONE MXU pass per tile:
#      out[b] = E^T @ [k | v]_flat[b]   -> (KP, 2*H*D)
#    E is resident in VMEM (constant index map, fetched once).  The T
#    reduction is tiled ("arbitrary", innermost) with an f32 VMEM accumulator;
#    the per-step window of E is a 128-aligned dynamic slice on the sublane
#    axis (tk always divides T -> no masking in the hot loop).
# ===========================================================================
def _kv_project_kernel(e_ref, kv_ref, out_ref, acc_ref, *, tk):
    t = pl.program_id(1)

    @pl.when(t == 0)
    def _():
        acc_ref[...] = jnp.zeros_like(acc_ref)

    start = pl.multiple_of(t * tk, tk)
    e_win = e_ref[pl.ds(start, tk), :]                  # (tk, KP) window of resident E
    # E_win^T @ [K|V]  (contract the T/sublane axis of both operands)
    acc_ref[...] += lax.dot_general(
        e_win, kv_ref[...], (((0,), (0,)), ((), ())),
        preferred_element_type=jnp.float32)

    @pl.when(t == pl.num_programs(1) - 1)
    def _():
        out_ref[...] = acc_ref[...].astype(out_ref.dtype)


def _pick_tk(T, max_tk=512):
    # Largest multiple of 128 (<= max_tk) that divides T, else T itself.
    # Guarantees full reduction tiles and 128-aligned windows into E.
    tk = min(max_tk, T) - (min(max_tk, T) % 128)
    while tk >= 128:
        if T % tk == 0:
            return tk
        tk -= 128
    return T


def pallas_kv_project(e, kv_flat):
    T, KP = e.shape
    B, T2, HD2 = kv_flat.shape
    assert T == T2
    tk = _pick_tk(T)
    kernel = functools.partial(_kv_project_kernel, tk=tk)
    return pl.pallas_call(
        kernel,
        out_shape=jax.ShapeDtypeStruct((B, KP, HD2), kv_flat.dtype),
        grid=(B, T // tk),
        in_specs=[
            pl.BlockSpec((T, KP), lambda b, t: (0, 0)),            # resident E
            pl.BlockSpec((None, tk, HD2), lambda b, t: (b, t, 0)),  # streamed [K|V]
        ],
        out_specs=pl.BlockSpec((None, KP, HD2), lambda b, t: (b, 0, 0)),
        scratch_shapes=[pltpu.VMEM((KP, HD2), jnp.float32)],
        compiler_params=pltpu.CompilerParams(
            dimension_semantics=("parallel", "arbitrary"),
            vmem_limit_bytes=_VMEM_LIMIT,
        ),
    )(e, kv_flat)


# ===========================================================================
# 3) Attention + fused W_0.  Grid (B, T//tq); k'/v'/W_0^T resident per batch;
#    q streams in lane-dense (tq, H*D) layout straight from stage 1 (no
#    wrapper transpose).  Per-head PV results are assembled lane-dense so the
#    output projection is a single (tq, H*D) @ (H*D, DIM) MXU matmul and the
#    kernel writes the final (tq, DIM) block directly.
# ===========================================================================
def _attn_w0_kernel(q_ref, kp_ref, vp_ref, w0_ref, o_ref, *, heads, dim_head):
    H, D = heads, dim_head

    per_head = []
    for h in range(H):                                   # static unroll (H small)
        qh = q_ref[:, h * D:(h + 1) * D]                 # (tq, D); scale already in W_q
        kh = kp_ref[h]                                   # (KP, D)
        vh = vp_ref[h]                                   # (KP, D)
        # scores: contract head dim of q and k'  -> (tq, KP), f32 accumulation
        s = lax.dot_general(qh, kh, (((1,), (1,)), ((), ())),
                            preferred_element_type=jnp.float32)
        m = jnp.max(s, axis=-1, keepdims=True)
        p = jnp.exp(s - m)
        l = jnp.sum(p, axis=-1, keepdims=True)
        p = p * pl.reciprocal(l)                         # exact reciprocal (EUP)
        per_head.append(jnp.dot(p.astype(vh.dtype), vh,
                                preferred_element_type=jnp.float32))  # (tq, D)

    # lane-dense (tq, H*D) operand -> ONE output-projection matmul (K = H*D)
    o2 = jnp.concatenate(per_head, axis=-1).astype(w0_ref.dtype)
    o_ref[...] = jnp.dot(o2, w0_ref[...],
                         preferred_element_type=jnp.float32).astype(o_ref.dtype)


def pallas_attention_w0(q, kp, vp, w0_t, *, heads, dim_head, tq=None):
    B, T, HD = q.shape
    KP = kp.shape[2]
    DIM = w0_t.shape[1]
    if tq is None:
        tq = 128 if _SMALL_VMEM else 256     # re-budgeted for v7x's 64 MiB VMEM
    tq = min(tq, T)
    kernel = functools.partial(_attn_w0_kernel, heads=heads, dim_head=dim_head)
    return pl.pallas_call(
        kernel,
        out_shape=jax.ShapeDtypeStruct((B, T, DIM), q.dtype),
        grid=(B, pl.cdiv(T, tq)),
        in_specs=[
            pl.BlockSpec((None, tq, HD), lambda b, t: (b, t, 0)),              # q stream
            pl.BlockSpec((None, heads, KP, dim_head), lambda b, t: (b, 0, 0, 0)),  # k' (resident/b)
            pl.BlockSpec((None, heads, KP, dim_head), lambda b, t: (b, 0, 0, 0)),  # v' (resident/b)
            pl.BlockSpec((HD, DIM), lambda b, t: (0, 0)),                      # W_0^T (resident)
        ],
        out_specs=pl.BlockSpec((None, tq, DIM), lambda b, t: (b, t, 0)),       # lane-dense
        compiler_params=pltpu.CompilerParams(
            dimension_semantics=("parallel", "parallel"),
            vmem_limit_bytes=_VMEM_LIMIT,
        ),
    )(q, kp, vp, w0_t)


# ---------------------------------------------------------------------------
# Full forward pass.
# ---------------------------------------------------------------------------
def linformer_attention_forward(x, E, w_qkv, w_0, heads, dim_head):
    B, T, DIM = x.shape
    H, D = heads, dim_head
    HD = H * D
    KP = E.shape[1]
    scale = float(D) ** (-0.5)

    # One-time WEIGHT-sized reshuffles (no activation-sized transposes):
    # to_qvk rows are indexed (d, qkv, h) by the reference rearrange; permute
    # them once so the projection emits q|k|v contiguous, h-major / d-minor.
    w3 = jnp.transpose(w_qkv.reshape(D, 3, H, DIM), (1, 2, 0, 3)).reshape(3, HD, DIM)
    w_q_t = jnp.transpose(w3[0]) * scale                            # (DIM, HD), scale folded
    w_kv_t = jnp.transpose(jnp.concatenate([w3[1], w3[2]], axis=0))  # (DIM, 2*HD)
    w0_t = jnp.transpose(w_0)                                        # (HD, DIM), h-major rows

    # 1) fused QKV projection (resident weights, single pass over x)
    q2d, kv2d = pallas_qkv_linear(x.reshape(B * T, DIM), w_q_t, w_kv_t)
    q3 = q2d.reshape(B, T, HD)                                       # metadata-only reshapes
    kv3 = kv2d.reshape(B, T, 2 * HD)

    # 2) Linformer E-projection of K and V (fused MXU pass per tile)
    kpvp = pallas_kv_project(E, kv3)                                 # (B, KP, 2*HD)

    # tiny (KP-row) tensors: split + per-head layout for the attention kernel
    kpvp = jnp.transpose(kpvp.reshape(B, KP, 2, H, D), (2, 0, 3, 1, 4))
    kp, vp = kpvp[0], kpvp[1]                                        # (B, H, KP, D)

    # 3) attention + fused W_0 -> final (B, T, DIM), lane-dense store
    return pallas_attention_w0(q3, kp, vp, w0_t, heads=H, dim_head=D)


# ---------------------------------------------------------------------------
# Pure-JAX reference (mirrors the PyTorch module exactly) for verification
# ---------------------------------------------------------------------------
def reference_forward(x, E, w_qkv, w_0, heads, dim_head):
    B, T, DIM = x.shape
    _dim = heads * dim_head
    qkv = jnp.einsum("btd,od->bto", x, w_qkv)
    qkv = qkv.reshape(B, T, dim_head, 3, heads)
    qkv = jnp.transpose(qkv, (3, 0, 4, 1, 2))
    q, k, v = qkv[0], qkv[1], qkv[2]
    v_p = jnp.einsum("bhjd,jk->bhkd", v, E)
    k_p = jnp.einsum("bhjd,jk->bhkd", k, E)
    scale = float(dim_head) ** (-0.5)
    s = jnp.einsum("bhid,bhjd->bhij", q, k_p) * scale
    attn = jax.nn.softmax(s, axis=-1)
    out = jnp.einsum("bhij,bhjd->bhid", attn, v_p)
    out = jnp.transpose(out, (0, 2, 1, 3)).reshape(B, T, _dim)
    return jnp.einsum("bti,oi->bto", out, w_0)


if __name__ == "__main__":
    # Small, shape-consistent configuration
    B, T, DIM = 2, 16, 32
    HEADS = 4
    DIM_HEAD = DIM // HEADS          # 8
    _DIM = HEADS * DIM_HEAD          # 32
    K_PROJ = 8                       # Linformer projection dim

    key = jax.random.PRNGKey(0)
    kx, ke, kq, kw = jax.random.split(key, 4)

    x = jax.random.normal(kx, (B, T, DIM), dtype=jnp.float32)
    E = jax.random.normal(ke, (T, K_PROJ), dtype=jnp.float32)                 # proj_mat
    w_qkv = jax.random.normal(kq, (3 * _DIM, DIM), dtype=jnp.float32) * 0.05  # to_qvk.weight
    w_0 = jax.random.normal(kw, (DIM, _DIM), dtype=jnp.float32) * 0.05        # W_0.weight

    fwd = jax.jit(linformer_attention_forward, static_argnums=(4, 5))
    out = jax.block_until_ready(fwd(x, E, w_qkv, w_0, HEADS, DIM_HEAD))

    ref = reference_forward(x, E, w_qkv, w_0, HEADS, DIM_HEAD)
    assert out.shape == (B, T, DIM)
    assert jnp.allclose(out, ref, atol=2e-3, rtol=2e-3), "mismatch vs reference"

    print("KERNEL_OK")
</pallas_src>

<mosaic_0001>
module attributes {stable_mosaic.version = 11 : i64} {
  func.func @_qkv_linear_kernel(%arg0: i32, %arg1: memref<32x32xf32, #tpu.memory_space<vmem>>, %arg2: memref<32x32xf32, #tpu.memory_space<vmem>>, %arg3: memref<32x64xf32, #tpu.memory_space<vmem>>, %arg4: memref<32x32xf32, #tpu.memory_space<vmem>>, %arg5: memref<32x64xf32, #tpu.memory_space<vmem>>) attributes {dimension_semantics = [#tpu.dimension_semantics<parallel>], iteration_bounds = array<i64: 1>, scalar_prefetch = 0 : i64, scratch_operands = 0 : i64, tpu.core_type = #tpu.core_type<tc>, window_params = [{transform_indices = @transform_0, window_bounds = array<i64: 32, 32>}, {pipeline_mode = #tpu.pipeline_mode<synchronous>, transform_indices = @transform_1, window_bounds = array<i64: 32, 32>}, {pipeline_mode = #tpu.pipeline_mode<synchronous>, transform_indices = @transform_2, window_bounds = array<i64: 32, 64>}, {transform_indices = @transform_3, window_bounds = array<i64: 32, 32>}, {transform_indices = @transform_4, window_bounds = array<i64: 32, 64>}]} {
    %c0 = arith.constant 0 : index
    %c0_0 = arith.constant 0 : index
    %0 = vector.load %arg1[%c0, %c0_0] : memref<32x32xf32, #tpu.memory_space<vmem>>, vector<32x32xf32>
    %c0_1 = arith.constant 0 : index
    %c0_2 = arith.constant 0 : index
    %1 = vector.load %arg2[%c0_1, %c0_2] : memref<32x32xf32, #tpu.memory_space<vmem>>, vector<32x32xf32>
    %cst = arith.constant dense<0.000000e+00> : vector<32x32xf32>
    %2 = tpu.matmul %0, %1, %cst {dimension_numbers = #tpu.dot_dimension_numbers<[1], [0], [0], [1], [0, 0, 1, 1], [], []>} : vector<32x32xf32>, vector<32x32xf32>, vector<32x32xf32> -> vector<32x32xf32>
    %c0_3 = arith.constant 0 : index
    %c0_4 = arith.constant 0 : index
    %3 = vector.load %arg4[%c0_3, %c0_4] : memref<32x32xf32, #tpu.memory_space<vmem>>, vector<32x32xf32>
    tpu.vector_store %arg4[%c0_3, %c0_4], %2 {strides = array<i32>} : memref<32x32xf32, #tpu.memory_space<vmem>>, vector<32x32xf32>,
    %c0_5 = arith.constant 0 : index
    %c0_6 = arith.constant 0 : index
    %4 = vector.load %arg3[%c0_5, %c0_6] : memref<32x64xf32, #tpu.memory_space<vmem>>, vector<32x64xf32>
    %cst_7 = arith.constant dense<0.000000e+00> : vector<32x64xf32>
    %5 = tpu.matmul %0, %4, %cst_7 {dimension_numbers = #tpu.dot_dimension_numbers<[1], [0], [0], [1], [0, 0, 1, 1], [], []>} : vector<32x32xf32>, vector<32x64xf32>, vector<32x64xf32> -> vector<32x64xf32>
    %c0_8 = arith.constant 0 : index
    %c0_9 = arith.constant 0 : index
    %6 = vector.load %arg5[%c0_8, %c0_9] : memref<32x64xf32, #tpu.memory_space<vmem>>, vector<32x64xf32>
    tpu.vector_store %arg5[%c0_8, %c0_9], %5 {strides = array<i32>} : memref<32x64xf32, #tpu.memory_space<vmem>>, vector<32x64xf32>,
    return
  }
  func.func @transform_0(%arg0: i32) -> (i32, i32) {
    %c0_i32 = arith.constant 0 : i32
    %c0_i32_0 = arith.constant 0 : i32
    return %arg0, %c0_i32 : i32, i32
  }
  func.func @transform_1(%arg0: i32) -> (i32, i32) {
    %c0_i32 = arith.constant 0 : i32
    %c0_i32_0 = arith.constant 0 : i32
    %c0_i32_1 = arith.constant 0 : i32
    return %c0_i32, %c0_i32_0 : i32, i32
  }
  func.func @transform_2(%arg0: i32) -> (i32, i32) {
    %c0_i32 = arith.constant 0 : i32
    %c0_i32_0 = arith.constant 0 : i32
    %c0_i32_1 = arith.constant 0 : i32
    return %c0_i32, %c0_i32_0 : i32, i32
  }
  func.func @transform_3(%arg0: i32) -> (i32, i32) {
    %c0_i32 = arith.constant 0 : i32
    %c0_i32_0 = arith.constant 0 : i32
    return %arg0, %c0_i32 : i32, i32
  }
  func.func @transform_4(%arg0: i32) -> (i32, i32) {
    %c0_i32 = arith.constant 0 : i32
    %c0_i32_0 = arith.constant 0 : i32
    return %arg0, %c0_i32 : i32, i32
  }
}

module attributes {stable_mosaic.version = 11 : i64} {
  func.func @_kv_project_kernel(%arg0: i32, %arg1: i32, %arg2: memref<16x8xf32, #tpu.memory_space<vmem>>, %arg3: memref<1x16x64xf32, #tpu.memory_space<vmem>>, %arg4: memref<1x8x64xf32, #tpu.memory_space<vmem>>, %arg5: memref<8x64xf32, #tpu.memory_space<vmem>>) attributes {dimension_semantics = [#tpu.dimension_semantics<parallel>, #tpu.dimension_semantics<arbitrary>], iteration_bounds = array<i64: 2, 1>, scalar_prefetch = 0 : i64, scratch_operands = 1 : i64, tpu.core_type = #tpu.core_type<tc>, window_params = [{pipeline_mode = #tpu.pipeline_mode<synchronous>, transform_indices = @transform_0, window_bounds = array<i64: 16, 8>}, {transform_indices = @transform_1, window_bounds = array<i64: 1, 16, 64>}, {transform_indices = @transform_2, window_bounds = array<i64: 1, 8, 64>}]} {
    %c0_i32 = arith.constant 0 : i32
    %0 = arith.cmpi eq, %arg1, %c0_i32 : i32
    %1 = arith.extui %0 : i1 to i32
    %c0_i32_0 = arith.constant 0 : i32
    %2 = arith.cmpi ne, %1, %c0_i32_0 : i32
    scf.if %2 {
      %cst_10 = arith.constant 0.000000e+00 : f32
      %16 = vector.broadcast %cst_10 : f32 to vector<8x64xf32>
      %c0_11 = arith.constant 0 : index
      %c0_12 = arith.constant 0 : index
      %17 = vector.load %arg5[%c0_11, %c0_12] : memref<8x64xf32, #tpu.memory_space<vmem>>, vector<8x64xf32>
      tpu.vector_store %arg5[%c0_11, %c0_12], %16 {strides = array<i32>} : memref<8x64xf32, #tpu.memory_space<vmem>>, vector<8x64xf32>,
    } else {
    }
    %c16_i32 = arith.constant 16 : i32
    %3 = arith.muli %arg1, %c16_i32 : i32
    %4 = tpu.assume_multiple %3, 16 : i32
    %5 = arith.index_cast %4 : i32 to index
    %c0 = arith.constant 0 : index
    %6 = vector.load %arg2[%5, %c0] : memref<16x8xf32, #tpu.memory_space<vmem>>, vector<16x8xf32>
    %c0_1 = arith.constant 0 : index
    %c0_2 = arith.constant 0 : index
    %7 = vector.load %arg5[%c0_1, %c0_2] : memref<8x64xf32, #tpu.memory_space<vmem>>, vector<8x64xf32>
    %c0_3 = arith.constant 0 : index
    %c0_4 = arith.constant 0 : index
    %c0_5 = arith.constant 0 : index
    %8 = vector.load %arg3[%c0_3, %c0_4, %c0_5] : memref<1x16x64xf32, #tpu.memory_space<vmem>>, vector<1x16x64xf32>
    %9 = vector.shape_cast %8 : vector<1x16x64xf32> to vector<16x64xf32>
    %cst = arith.constant dense<0.000000e+00> : vector<8x64xf32>
    %10 = tpu.matmul %6, %9, %cst {dimension_numbers = #tpu.dot_dimension_numbers<[0], [0], [1], [1], [0, 1, 1, 1], [], []>} : vector<16x8xf32>, vector<16x64xf32>, vector<8x64xf32> -> vector<8x64xf32>
    %11 = arith.addf %7, %10 : vector<8x64xf32>
    %c0_6 = arith.constant 0 : index
    %c0_7 = arith.constant 0 : index
    %12 = vector.load %arg5[%c0_6, %c0_7] : memref<8x64xf32, #tpu.memory_space<vmem>>, vector<8x64xf32>
    tpu.vector_store %arg5[%c0_6, %c0_7], %11 {strides = array<i32>} : memref<8x64xf32, #tpu.memory_space<vmem>>, vector<8x64xf32>,
    %c0_i32_8 = arith.constant 0 : i32
    %13 = arith.cmpi eq, %arg1, %c0_i32_8 : i32
    %14 = arith.extui %13 : i1 to i32
    %c0_i32_9 = arith.constant 0 : i32
    %15 = arith.cmpi ne, %14, %c0_i32_9 : i32
    scf.if %15 {
      %c0_10 = arith.constant 0 : index
      %c0_11 = arith.constant 0 : index
      %16 = vector.load %arg5[%c0_10, %c0_11] : memref<8x64xf32, #tpu.memory_space<vmem>>, vector<8x64xf32>
      %c0_12 = arith.constant 0 : index
      %c0_13 = arith.constant 0 : index
      %c0_14 = arith.constant 0 : index
      %17 = vector.load %arg4[%c0_12, %c0_13, %c0_14] : memref<1x8x64xf32, #tpu.memory_space<vmem>>, vector<1x8x64xf32>
      %18 = vector.shape_cast %17 : vector<1x8x64xf32> to vector<8x64xf32>
      %19 = vector.shape_cast %16 : vector<8x64xf32> to vector<1x8x64xf32>
      tpu.vector_store %arg4[%c0_12, %c0_13, %c0_14], %19 {strides = array<i32>} : memref<1x8x64xf32, #tpu.memory_space<vmem>>, vector<1x8x64xf32>,
    } else {
    }
    return
  }
  func.func @transform_0(%arg0: i32, %arg1: i32) -> (i32, i32) {
    %c0_i32 = arith.constant 0 : i32
    %c0_i32_0 = arith.constant 0 : i32
    %c0_i32_1 = arith.constant 0 : i32
    return %c0_i32, %c0_i32_0 : i32, i32
  }
  func.func @transform_1(%arg0: i32, %arg1: i32) -> (i32, i32, i32) {
    %c0_i32 = arith.constant 0 : i32
    %c0_i32_0 = arith.constant 0 : i32
    return %arg0, %arg1, %c0_i32 : i32, i32, i32
  }
  func.func @transform_2(%arg0: i32, %arg1: i32) -> (i32, i32, i32) {
    %c0_i32 = arith.constant 0 : i32
    %c0_i32_0 = arith.constant 0 : i32
    %c0_i32_1 = arith.constant 0 : i32
    return %arg0, %c0_i32, %c0_i32_0 : i32, i32, i32
  }
}

module attributes {stable_mosaic.version = 11 : i64} {
  func.func @_attn_w0_kernel(%arg0: i32, %arg1: i32, %arg2: memref<1x16x32xf32, #tpu.memory_space<vmem>>, %arg3: memref<1x4x8x8xf32, #tpu.memory_space<vmem>>, %arg4: memref<1x4x8x8xf32, #tpu.memory_space<vmem>>, %arg5: memref<32x32xf32, #tpu.memory_space<vmem>>, %arg6: memref<1x16x32xf32, #tpu.memory_space<vmem>>) attributes {dimension_semantics = [#tpu.dimension_semantics<parallel>, #tpu.dimension_semantics<parallel>], iteration_bounds = array<i64: 2, 1>, scalar_prefetch = 0 : i64, scratch_operands = 0 : i64, tpu.core_type = #tpu.core_type<tc>, window_params = [{transform_indices = @transform_0, window_bounds = array<i64: 1, 16, 32>}, {transform_indices = @transform_1, window_bounds = array<i64: 1, 4, 8, 8>}, {transform_indices = @transform_2, window_bounds = array<i64: 1, 4, 8, 8>}, {pipeline_mode = #tpu.pipeline_mode<synchronous>, transform_indices = @transform_3, window_bounds = array<i64: 32, 32>}, {transform_indices = @transform_4, window_bounds = array<i64: 1, 16, 32>}]} {
    %c0 = arith.constant 0 : index
    %c0_0 = arith.constant 0 : index
    %c0_1 = arith.constant 0 : index
    %0 = vector.load %arg2[%c0, %c0_0, %c0_1] : memref<1x16x32xf32, #tpu.memory_space<vmem>>, vector<1x16x8xf32>
    %1 = vector.shape_cast %0 : vector<1x16x8xf32> to vector<16x8xf32>
    %c0_2 = arith.constant 0 : index
    %c0_3 = arith.constant 0 : index
    %c0_4 = arith.constant 0 : index
    %c0_5 = arith.constant 0 : index
    %2 = vector.load %arg3[%c0_2, %c0_3, %c0_4, %c0_5] : memref<1x4x8x8xf32, #tpu.memory_space<vmem>>, vector<1x1x8x8xf32>
    %3 = vector.shape_cast %2 : vector<1x1x8x8xf32> to vector<8x8xf32>
    %c0_6 = arith.constant 0 : index
    %c0_7 = arith.constant 0 : index
    %c0_8 = arith.constant 0 : index
    %c0_9 = arith.constant 0 : index
    %4 = vector.load %arg4[%c0_6, %c0_7, %c0_8, %c0_9] : memref<1x4x8x8xf32, #tpu.memory_space<vmem>>, vector<1x1x8x8xf32>
    %5 = vector.shape_cast %4 : vector<1x1x8x8xf32> to vector<8x8xf32>
    %cst = arith.constant dense<0.000000e+00> : vector<16x8xf32>
    %6 = tpu.matmul %1, %3, %cst {dimension_numbers = #tpu.dot_dimension_numbers<[1], [1], [0], [0], [0, 0, 1, 0], [], []>} : vector<16x8xf32>, vector<8x8xf32>, vector<16x8xf32> -> vector<16x8xf32>
    %cst_10 = arith.constant dense<0xFF800000> : vector<16xf32>
    %7 = vector.multi_reduction <maximumf>, %6, %cst_10 [1] : vector<16x8xf32> to vector<16xf32>
    %8 = vector.shape_cast %7 : vector<16xf32> to vector<16x1xf32>
    %9 = vector.broadcast %8 : vector<16x1xf32> to vector<16x8xf32>
    %10 = arith.subf %6, %9 : vector<16x8xf32>
    %11 = math.exp %10 : vector<16x8xf32>
    %cst_11 = arith.constant dense<0.000000e+00> : vector<16xf32>
    %12 = vector.multi_reduction <add>, %11, %cst_11 [1] : vector<16x8xf32> to vector<16xf32>
    %13 = vector.shape_cast %12 : vector<16xf32> to vector<16x1xf32>
    %14 = tpu.reciprocal %13 : vector<16x1xf32> -> vector<16x1xf32>
    %15 = vector.broadcast %14 : vector<16x1xf32> to vector<16x8xf32>
    %16 = arith.mulf %11, %15 : vector<16x8xf32>
    %cst_12 = arith.constant dense<0.000000e+00> : vector<16x8xf32>
    %17 = tpu.matmul %16, %5, %cst_12 {dimension_numbers = #tpu.dot_dimension_numbers<[1], [0], [0], [1], [0, 0, 1, 1], [], []>} : vector<16x8xf32>, vector<8x8xf32>, vector<16x8xf32> -> vector<16x8xf32>
    %c0_13 = arith.constant 0 : index
    %c0_14 = arith.constant 0 : index
    %c8 = arith.constant 8 : index
    %18 = vector.load %arg2[%c0_13, %c0_14, %c8] : memref<1x16x32xf32, #tpu.memory_space<vmem>>, vector<1x16x8xf32>
    %19 = vector.shape_cast %18 : vector<1x16x8xf32> to vector<16x8xf32>
    %c0_15 = arith.constant 0 : index
    %c1 = arith.constant 1 : index
    %c0_16 = arith.constant 0 : index
    %c0_17 = arith.constant 0 : index
    %20 = vector.load %arg3[%c0_15, %c1, %c0_16, %c0_17] : memref<1x4x8x8xf32, #tpu.memory_space<vmem>>, vector<1x1x8x8xf32>
    %21 = vector.shape_cast %20 : vector<1x1x8x8xf32> to vector<8x8xf32>
    %c0_18 = arith.constant 0 : index
    %c1_19 = arith.constant 1 : index
    %c0_20 = arith.constant 0 : index
    %c0_21 = arith.constant 0 : index
    %22 = vector.load %arg4[%c0_18, %c1_19, %c0_20, %c0_21] : memref<1x4x8x8xf32, #tpu.memory_space<vmem>>, vector<1x1x8x8xf32>
    %23 = vector.shape_cast %22 : vector<1x1x8x8xf32> to vector<8x8xf32>
    %cst_22 = arith.constant dense<0.000000e+00> : vector<16x8xf32>
    %24 = tpu.matmul %19, %21, %cst_22 {dimension_numbers = #tpu.dot_dimension_numbers<[1], [1], [0], [0], [0, 0, 1, 0], [], []>} : vector<16x8xf32>, vector<8x8xf32>, vector<16x8xf32> -> vector<16x8xf32>
    %cst_23 = arith.constant dense<0xFF800000> : vector<16xf32>
    %25 = vector.multi_reduction <maximumf>, %24, %cst_23 [1] : vector<16x8xf32> to vector<16xf32>
    %26 = vector.shape_cast %25 : vector<16xf32> to vector<16x1xf32>
    %27 = vector.broadcast %26 : vector<16x1xf32> to vector<16x8xf32>
    %28 = arith.subf %24, %27 : vector<16x8xf32>
    %29 = math.exp %28 : vector<16x8xf32>
    %cst_24 = arith.constant dense<0.000000e+00> : vector<16xf32>
    %30 = vector.multi_reduction <add>, %29, %cst_24 [1] : vector<16x8xf32> to vector<16xf32>
    %31 = vector.shape_cast %30 : vector<16xf32> to vector<16x1xf32>
    %32 = tpu.reciprocal %31 : vector<16x1xf32> -> vector<16x1xf32>
    %33 = vector.broadcast %32 : vector<16x1xf32> to vector<16x8xf32>
    %34 = arith.mulf %29, %33 : vector<16x8xf32>
    %cst_25 = arith.constant dense<0.000000e+00> : vector<16x8xf32>
    %35 = tpu.matmul %34, %23, %cst_25 {dimension_numbers = #tpu.dot_dimension_numbers<[1], [0], [0], [1], [0, 0, 1, 1], [], []>} : vector<16x8xf32>, vector<8x8xf32>, vector<16x8xf32> -> vector<16x8xf32>
    %c0_26 = arith.constant 0 : index
    %c0_27 = arith.constant 0 : index
    %c16 = arith.constant 16 : index
    %36 = vector.load %arg2[%c0_26, %c0_27, %c16] : memref<1x16x32xf32, #tpu.memory_space<vmem>>, vector<1x16x8xf32>
    %37 = vector.shape_cast %36 : vector<1x16x8xf32> to vector<16x8xf32>
    %c0_28 = arith.constant 0 : index
    %c2 = arith.constant 2 : index
    %c0_29 = arith.constant 0 : index
    %c0_30 = arith.constant 0 : index
    %38 = vector.load %arg3[%c0_28, %c2, %c0_29, %c0_30] : memref<1x4x8x8xf32, #tpu.memory_space<vmem>>, vector<1x1x8x8xf32>
    %39 = vector.shape_cast %38 : vector<1x1x8x8xf32> to vector<8x8xf32>
    %c0_31 = arith.constant 0 : index
    %c2_32 = arith.constant 2 : index
    %c0_33 = arith.constant 0 : index
    %c0_34 = arith.constant 0 : index
    %40 = vector.load %arg4[%c0_31, %c2_32, %c0_33, %c0_34] : memref<1x4x8x8xf32, #tpu.memory_space<vmem>>, vector<1x1x8x8xf32>
    %41 = vector.shape_cast %40 : vector<1x1x8x8xf32> to vector<8x8xf32>
    %cst_35 = arith.constant dense<0.000000e+00> : vector<16x8xf32>
    %42 = tpu.matmul %37, %39, %cst_35 {dimension_numbers = #tpu.dot_dimension_numbers<[1], [1], [0], [0], [0, 0, 1, 0], [], []>} : vector<16x8xf32>, vector<8x8xf32>, vector<16x8xf32> -> vector<16x8xf32>
    %cst_36 = arith.constant dense<0xFF800000> : vector<16xf32>
    %43 = vector.multi_reduction <maximumf>, %42, %cst_36 [1] : vector<16x8xf32> to vector<16xf32>
    %44 = vector.shape_cast %43 : vector<16xf32> to vector<16x1xf32>
    %45 = vector.broadcast %44 : vector<16x1xf32> to vector<16x8xf32>
    %46 = arith.subf %42, %45 : vector<16x8xf32>
    %47 = math.exp %46 : vector<16x8xf32>
    %cst_37 = arith.constant dense<0.000000e+00> : vector<16xf32>
    %48 = vector.multi_reduction <add>, %47, %cst_37 [1] : vector<16x8xf32> to vector<16xf32>
    %49 = vector.shape_cast %48 : vector<16xf32> to vector<16x1xf32>
    %50 = tpu.reciprocal %49 : vector<16x1xf32> -> vector<16x1xf32>
    %51 = vector.broadcast %50 : vector<16x1xf32> to vector<16x8xf32>
    %52 = arith.mulf %47, %51 : vector<16x8xf32>
    %cst_38 = arith.constant dense<0.000000e+00> : vector<16x8xf32>
    %53 = tpu.matmul %52, %41, %cst_38 {dimension_numbers = #tpu.dot_dimension_numbers<[1], [0], [0], [1], [0, 0, 1, 1], [], []>} : vector<16x8xf32>, vector<8x8xf32>, vector<16x8xf32> -> vector<16x8xf32>
    %c0_39 = arith.constant 0 : index
    %c0_40 = arith.constant 0 : index
    %c24 = arith.constant 24 : index
    %54 = vector.load %arg2[%c0_39, %c0_40, %c24] : memref<1x16x32xf32, #tpu.memory_space<vmem>>, vector<1x16x8xf32>
    %55 = vector.shape_cast %54 : vector<1x16x8xf32> to vector<16x8xf32>
    %c0_41 = arith.constant 0 : index
    %c3 = arith.constant 3 : index
    %c0_42 = arith.constant 0 : index
    %c0_43 = arith.constant 0 : index
    %56 = vector.load %arg3[%c0_41, %c3, %c0_42, %c0_43] : memref<1x4x8x8xf32, #tpu.memory_space<vmem>>, vector<1x1x8x8xf32>
    %57 = vector.shape_cast %56 : vector<1x1x8x8xf32> to vector<8x8xf32>
    %c0_44 = arith.constant 0 : index
    %c3_45 = arith.constant 3 : index
    %c0_46 = arith.constant 0 : index
    %c0_47 = arith.constant 0 : index
    %58 = vector.load %arg4[%c0_44, %c3_45, %c0_46, %c0_47] : memref<1x4x8x8xf32, #tpu.memory_space<vmem>>, vector<1x1x8x8xf32>
    %59 = vector.shape_cast %58 : vector<1x1x8x8xf32> to vector<8x8xf32>
    %cst_48 = arith.constant dense<0.000000e+00> : vector<16x8xf32>
    %60 = tpu.matmul %55, %57, %cst_48 {dimension_numbers = #tpu.dot_dimension_numbers<[1], [1], [0], [0], [0, 0, 1, 0], [], []>} : vector<16x8xf32>, vector<8x8xf32>, vector<16x8xf32> -> vector<16x8xf32>
    %cst_49 = arith.constant dense<0xFF800000> : vector<16xf32>
    %61 = vector.multi_reduction <maximumf>, %60, %cst_49 [1] : vector<16x8xf32> to vector<16xf32>
    %62 = vector.shape_cast %61 : vector<16xf32> to vector<16x1xf32>
    %63 = vector.broadcast %62 : vector<16x1xf32> to vector<16x8xf32>
    %64 = arith.subf %60, %63 : vector<16x8xf32>
    %65 = math.exp %64 : vector<16x8xf32>
    %cst_50 = arith.constant dense<0.000000e+00> : vector<16xf32>
    %66 = vector.multi_reduction <add>, %65, %cst_50 [1] : vector<16x8xf32> to vector<16xf32>
    %67 = vector.shape_cast %66 : vector<16xf32> to vector<16x1xf32>
    %68 = tpu.reciprocal %67 : vector<16x1xf32> -> vector<16x1xf32>
    %69 = vector.broadcast %68 : vector<16x1xf32> to vector<16x8xf32>
    %70 = arith.mulf %65, %69 : vector<16x8xf32>
    %cst_51 = arith.constant dense<0.000000e+00> : vector<16x8xf32>
    %71 = tpu.matmul %70, %59, %cst_51 {dimension_numbers = #tpu.dot_dimension_numbers<[1], [0], [0], [1], [0, 0, 1, 1], [], []>} : vector<16x8xf32>, vector<8x8xf32>, vector<16x8xf32> -> vector<16x8xf32>
    %72 = tpu.concatenate %17, %35, %53, %71 in 1 : vector<16x8xf32>, vector<16x8xf32>, vector<16x8xf32>, vector<16x8xf32> -> vector<16x32xf32>
    %c0_52 = arith.constant 0 : index
    %c0_53 = arith.constant 0 : index
    %73 = vector.load %arg5[%c0_52, %c0_53] : memref<32x32xf32, #tpu.memory_space<vmem>>, vector<32x32xf32>
    %cst_54 = arith.constant dense<0.000000e+00> : vector<16x32xf32>
    %74 = tpu.matmul %72, %73, %cst_54 {dimension_numbers = #tpu.dot_dimension_numbers<[1], [0], [0], [1], [0, 0, 1, 1], [], []>} : vector<16x32xf32>, vector<32x32xf32>, vector<16x32xf32> -> vector<16x32xf32>
    %c0_55 = arith.constant 0 : index
    %c0_56 = arith.constant 0 : index
    %c0_57 = arith.constant 0 : index
    %75 = vector.load %arg6[%c0_55, %c0_56, %c0_57] : memref<1x16x32xf32, #tpu.memory_space<vmem>>, vector<1x16x32xf32>
    %76 = vector.shape_cast %75 : vector<1x16x32xf32> to vector<16x32xf32>
    %77 = vector.shape_cast %74 : vector<16x32xf32> to vector<1x16x32xf32>
    tpu.vector_store %arg6[%c0_55, %c0_56, %c0_57], %77 {strides = array<i32>} : memref<1x16x32xf32, #tpu.memory_space<vmem>>, vector<1x16x32xf32>,
    return
  }
  func.func @transform_0(%arg0: i32, %arg1: i32) -> (i32, i32, i32) {
    %c0_i32 = arith.constant 0 : i32
    %c0_i32_0 = arith.constant 0 : i32
    return %arg0, %arg1, %c0_i32 : i32, i32, i32
  }
  func.func @transform_1(%arg0: i32, %arg1: i32) -> (i32, i32, i32, i32) {
    %c0_i32 = arith.constant 0 : i32
    %c0_i32_0 = arith.constant 0 : i32
    %c0_i32_1 = arith.constant 0 : i32
    %c0_i32_2 = arith.constant 0 : i32
    return %arg0, %c0_i32, %c0_i32_0, %c0_i32_1 : i32, i32, i32, i32
  }
  func.func @transform_2(%arg0: i32, %arg1: i32) -> (i32, i32, i32, i32) {
    %c0_i32 = arith.constant 0 : i32
    %c0_i32_0 = arith.constant 0 : i32
    %c0_i32_1 = arith.constant 0 : i32
    %c0_i32_2 = arith.constant 0 : i32
    return %arg0, %c0_i32, %c0_i32_0, %c0_i32_1 : i32, i32, i32, i32
  }
  func.func @transform_3(%arg0: i32, %arg1: i32) -> (i32, i32) {
    %c0_i32 = arith.constant 0 : i32
    %c0_i32_0 = arith.constant 0 : i32
    %c0_i32_1 = arith.constant 0 : i32
    return %c0_i32, %c0_i32_0 : i32, i32
  }
  func.func @transform_4(%arg0: i32, %arg1: i32) -> (i32, i32, i32) {
    %c0_i32 = arith.constant 0 : i32
    %c0_i32_0 = arith.constant 0 : i32
    return %arg0, %arg1, %c0_i32 : i32, i32, i32
  }
}

</mosaic_0001>

<llo_original>
// kernel: linformer_attention_forward.4
$region0: #{linformer_attention_forward.4}
  #allocation0 [shape = 'u32[]', space=smem, size = 0x4, offset = 0x4, fixed_abs, tag = 'smem constant byte address 0x4 - core index']
  #allocation1 [shape = 'u32[144,128]{1,0:T(1,128)}', space=vmem, size = 0x12000, scoped, tag = 'internal scratch']
  #allocation2 [shape = 'f32[8,64]{1,0:T(8,128)}', space=vmem, size = 0x1000, scoped, tag = 'scratch operand']
  %s0 = inlined_call_operand.hbm [shape: f32[16,8], index: 0, kind: input, shape index: {}]
  %s1 = inlined_call_operand.hbm [shape: f32[2,16,64], index: 1, kind: input, shape index: {}]
  %s2 = inlined_call_operand.hbm [shape: f32[2,8,64], index: 2, kind: output, shape index: {}]
  %s3 = sld [smem:[#allocation0]]
  $region57: #{linformer_attention_forward.4} parent=0
    _
  %s5 = ssub.s32 1, %s3
  %s6 = scalar_select 0, %s5, %s3
  $region1: #{linformer_attention_forward.4} parent=0
    #allocation3 [shape = 'u8[8192]{0}', space=vmem, size = 0x2000, scoped, tag = 'input window, operand 0, single buffered']
    #allocation4 [shape = 's32[2]{0}', space=sflag, size = 0x8, scoped, tag = 'scoped memory for linformer_attention_forward.4']
    #allocation5 [shape = 's32[2]{0}', space=sflag, size = 0x8, scoped, tag = 'scoped memory for linformer_attention_forward.4']
    #allocation6 [shape = 'u8[16384]{0}', space=vmem, size = 0x4000, scoped, tag = 'input window, operand 1']
    #allocation7 [shape = 's32[2]{0}', space=sflag, size = 0x8, scoped, tag = 'scoped memory for linformer_attention_forward.4']
    #allocation8 [shape = 'u8[8192]{0}', space=vmem, size = 0x2000, scoped, tag = 'output window, operand 0']
    %7 = vsyncpa [#allocation4], 0
    %8 = vsyncpa [#allocation7], 0
    %s9 = scalar_lea.sflag [#allocation7], 1
    %10 = vsyncpa %s9, 0
    %11 = vsyncpa [#allocation5], 0
    %s12 = scalar_lea.sflag [#allocation5], 1
    %13 = vsyncpa %s12, 0
    loop: start=0, step=1, limit=4
    $region2: #{linformer_attention_forward.4} parent=1 // loop_pre_header
      _
    $region3: #{linformer_attention_forward.4} parent=1 // loop_header
      %s15 = sphi 0, %s19
      %p16 = scmp.ge.s32.totalorder %s15, 4
      %s22 = sphi 0, %s34
      %s23 = sphi 0, %s30
      %s24 = sphi 0, %s22
      %s25 = sphi 0, %s23
      %s26 = sphi 0, %s24
      %s27 = sphi 0, %s25
      %s35 = sphi 0, %s35
      %s37 = sphi 0, %s35
      %s38 = sphi 0, %s37
      %s52 = sphi 0, %s38
      %s60 = sphi 0, %s62
      %s63 = sphi 0, %s60
      %s64 = sphi 0, %s63
      %s80 = sphi 0, %s64
      %s86 = sphi 0, %s88
      %s89 = sphi 0, %s86
      %s90 = sphi 0, %s89
      %s106 = sphi 0, %s90
    $region4: #{linformer_attention_forward.4} parent=1 // loop_header_branch
      %18 = sbr.rel (%p16) target = $region8
    $region5: #{linformer_attention_forward.4} parent=1 // loop_body
      %s20 = ssub.s32 %s15, 1
      %s21 = ssub.s32 %s15, 2
      %s28 = sadd.s32 1, %s23
      %p29 = scmp.ge.s32.totalorder %s28, 1
      %s30 = scalar_select %p29, 0, %s28
      %s31 = sadd.s32 1, %s22
      %s32 = scalar_select %p29, %s31, %s22
      %p33 = scmp.ge.s32.totalorder %s32, 2
      %s34 = scalar_select %p33, 0, %s32
      %s36 = sadd.s32 %s35, 1
      %p39 = scmp.eq.s32.totalorder %s15, 1
      %p40 = scmp.ne.s32.totalorder %s35, %s37
      %p41 = scmp.eq.s32.totalorder %s15, 0
      %p42 = por %p40, %p41
      %p43 = scmp.ne.s32.totalorder %s35, %s37
      %p44 = scmp.eq.s32.totalorder %s20, 1
      %p45 = por %p43, %p44
      %p46 = scmp.ne.s32.totalorder %s37, %s38
      %p47 = scmp.eq.s32.totalorder %s20, 0
      %p48 = por %p46, %p47
      %p49 = scmp.ne.s32.totalorder %s37, %s38
      %p50 = scmp.eq.s32.totalorder %s21, 1
      %p51 = por %p49, %p50
      %p53 = scmp.ne.s32.totalorder %s38, %s52
      %p54 = scmp.eq.s32.totalorder %s21, 0
      %p55 = por %p53, %p54
      %s56 = ssub.s32 %s22, %s34
      %s57 = ssub.s32 %s23, %s30
      %s58 = sor.u32 %s56, %s57
      %p59 = scmp.eq.s32.totalorder %s58, 0
      %s61 = sadd.s32 %s60, 1
      %s62 = scalar_select %p59, %s60, %s61
      %p65 = pneg %p59
      %p66 = scmp.eq.s32.totalorder %s15, 1
      %p67 = por %p65, %p66
      %p68 = scmp.ne.s32.totalorder %s60, %s63
      %p69 = scmp.eq.s32.totalorder %s15, 0
      %p70 = por %p68, %p69
      %p71 = scmp.ne.s32.totalorder %s60, %s63
      %p72 = scmp.eq.s32.totalorder %s20, 1
      %p73 = por %p71, %p72
      %p74 = scmp.ne.s32.totalorder %s63, %s64
      %p75 = scmp.eq.s32.totalorder %s20, 0
      %p76 = por %p74, %p75
      %p77 = scmp.ne.s32.totalorder %s63, %s64
      %p78 = scmp.eq.s32.totalorder %s21, 1
      %p79 = por %p77, %p78
      %p81 = scmp.ne.s32.totalorder %s64, %s80
      %p82 = scmp.eq.s32.totalorder %s21, 0
      %p83 = por %p81, %p82
      %s84 = ssub.s32 %s22, %s34
      %p85 = scmp.eq.s32.totalorder %s84, 0
      %s87 = sadd.s32 %s86, 1
      %s88 = scalar_select %p85, %s86, %s87
      %p91 = pneg %p85
      %p92 = scmp.eq.s32.totalorder %s15, 1
      %p93 = por %p91, %p92
      %p94 = scmp.ne.s32.totalorder %s86, %s89
      %p95 = scmp.eq.s32.totalorder %s15, 0
      %p96 = por %p94, %p95
      %p97 = scmp.ne.s32.totalorder %s86, %s89
      %p98 = scmp.eq.s32.totalorder %s20, 1
      %p99 = por %p97, %p98
      %p100 = scmp.ne.s32.totalorder %s89, %s90
      %p101 = scmp.eq.s32.totalorder %s20, 0
      %p102 = por %p100, %p101
      %p103 = scmp.ne.s32.totalorder %s89, %s90
      %p104 = scmp.eq.s32.totalorder %s21, 1
      %p105 = por %p103, %p104
      %p107 = scmp.ne.s32.totalorder %s90, %s106
      %p108 = scmp.eq.s32.totalorder %s21, 0
      %p109 = por %p107, %p108
      %p110 = scmp.le.s32.totalorder 1, %s15
      %p111 = scmp.lt.s32.totalorder %s15, 3
      %p112 = pnand %p110, %p111
      %p113 = pneg %p112
      // Predicated region
      $region9: #{linformer_attention_forward.4} parent=5 // pred_check
        _
      $region10: #{linformer_attention_forward.4} parent=5 // pred_check_branch
        %115 = sbr.rel (%p112) target = $region12
      $region11: #{linformer_attention_forward.4} parent=5 // pred_region
        %s116 = ssub.s32 %s15, 1
        // Predicated region
        $region13: #{linformer_attention_forward.4} parent=11 // pred_check
          %p117 = pneg %p48
        $region14: #{linformer_attention_forward.4} parent=11 // pred_check_branch
          %119 = sbr.rel (%p117) target = $region16
        $region15: #{linformer_attention_forward.4} parent=11 // pred_region
          %s121 = ssub.s32 256, 256
          %122 = vsyncadd [#allocation4], %s121
          %s123 = sshll.u32 [#allocation3], 4
          %s124 = int_to_ptr.vmem [resolvable:$true] %s123
          %129 = dma.hbm_to_vmem [thread:$0]  %s0, 256, %s124, [#allocation4], 128, 128, 8
        $region16: #{linformer_attention_forward.4} parent=11 // pred_fallthru
          _
      $region12: #{linformer_attention_forward.4} parent=5 // pred_fallthru
        _
      %p130 = scmp.lt.s32.totalorder %s15, 2
      // Predicated region
      $region17: #{linformer_attention_forward.4} parent=5 // pred_check
        %p131 = pneg %p130
      $region18: #{linformer_attention_forward.4} parent=5 // pred_check_branch
        %133 = sbr.rel (%p131) target = $region20
      $region19: #{linformer_attention_forward.4} parent=5 // pred_region
        // Predicated region
        $region21: #{linformer_attention_forward.4} parent=19 // pred_check
          %p134 = pneg %p70
        $region22: #{linformer_attention_forward.4} parent=19 // pred_check_branch
          %136 = sbr.rel (%p134) target = $region24
        $region23: #{linformer_attention_forward.4} parent=19 // pred_region
          %s137 = sand.u32 %s60, 1
          %s138 = scalar_lea.sflag [#allocation7], %s137
          %s139 = sand.u32 %s60, 1
          %s140 = smul.addr %s139, 16
          %s141 = scalar_lea.vmem [#allocation6], %s140
          %s142 = smul.u32 2, %s23
          %s144 = ssub.s32 256, 256
          %145 = vsyncadd %s138, %s144
          %s146 = smul.addr %s22, 2
          %s147 = sadd.s32 %s142, %s146
          %s148 = smul.addr %s147, 128
          %s149 = scalar_lea.hbm %s1, %s148
          %s150 = sshll.u32 %s141, 4
          %s151 = int_to_ptr.vmem [resolvable:$true] %s150
          %156 = dma.hbm_to_vmem [thread:$0]  %s149, 256, %s151, %s138, 128, 128, 8
        $region24: #{linformer_attention_forward.4} parent=19 // pred_fallthru
          _
      $region20: #{linformer_attention_forward.4} parent=5 // pred_fallthru
        _
      %p157 = scmp.le.s32.totalorder 1, %s15
      %p158 = scmp.lt.s32.totalorder %s15, 3
      %p159 = pnand %p157, %p158
      %p160 = pneg %p159
      // Predicated region
      $region25: #{linformer_attention_forward.4} parent=5 // pred_check
        _
      $region26: #{linformer_attention_forward.4} parent=5 // pred_check_branch
        %162 = sbr.rel (%p159) target = $region28
      $region27: #{linformer_attention_forward.4} parent=5 // pred_region
        %s163 = ssub.s32 %s15, 1
        // Predicated region
        $region29: #{linformer_attention_forward.4} parent=27 // pred_check
          %p164 = pneg %p48
        $region30: #{linformer_attention_forward.4} parent=27 // pred_check_branch
          %166 = sbr.rel (%p164) target = $region32
        $region31: #{linformer_attention_forward.4} parent=27 // pred_region
          %167 = dma.done [#allocation4], 256
        $region32: #{linformer_attention_forward.4} parent=27 // pred_fallthru
          _
        %s168 = sand.u32 %s63, 1
        %s169 = scalar_lea.sflag [#allocation7], %s168
        %s170 = sand.u32 %s63, 1
        %s171 = smul.addr %s170, 16
        %s172 = scalar_lea.vmem [#allocation6], %s171
        // Predicated region
        $region33: #{linformer_attention_forward.4} parent=27 // pred_check
          %p173 = pneg %p76
        $region34: #{linformer_attention_forward.4} parent=27 // pred_check_branch
          %175 = sbr.rel (%p173) target = $region36
        $region35: #{linformer_attention_forward.4} parent=27 // pred_region
          %176 = dma.done %s169, 256
        $region36: #{linformer_attention_forward.4} parent=27 // pred_fallthru
          _
        %p177 = pneg %p48
        %p178 = pneg %p45
        %s179 = sand.u32 %s63, 1
        %s180 = scalar_lea.sflag [#allocation7], %s179
        %s181 = sand.u32 %s63, 1
        %s182 = smul.addr %s181, 16
        %s183 = scalar_lea.vmem [#allocation6], %s182
        %p184 = pneg %p76
        %p185 = pneg %p73
        %p186 = pneg %p102
        %p187 = pneg %p99
        %s188 = sand.u32 %s89, 1
        %s189 = scalar_lea.sflag [#allocation5], %s188
        %s190 = sand.u32 %s89, 1
        %s191 = smul.addr %s190, 8
        %s192 = scalar_lea.vmem [#allocation8], %s191
        %s193 = smul.u32 2, %s25
        %p194 = scmp.eq.s32.totalorder %s25, 0
        // Predicated region
        $region37: #{linformer_attention_forward.4} parent=27 // pred_check
          %p195 = pneg %p194
        $region38: #{linformer_attention_forward.4} parent=27 // pred_check_branch
          %197 = sbr.rel (%p195) target = $region40
        $region39: #{linformer_attention_forward.4} parent=27 // pred_region
          %vm198 = vcmask 523264
          %199 = vst.msk [vmem:[#allocation2] sm:$0xff] %vm198, 0.0
        $region40: #{linformer_attention_forward.4} parent=27 // pred_fallthru
          _
        %s200 = smul.u32 %s25, 16
        %s201 = scalar_lea.vmem [#allocation3], %s200
        %v202 = vld [vmem:[%s201] sm:$0xff]
        %v203 = vld [vmem:[%s201 + $0x8] sm:$0xff]
        %v204 = vld [vmem:[#allocation2] sm:$0xff]
        %v205 = vld [vmem:[%s172] sm:$0xff]
        %v206 = vld [vmem:[%s172 + $0x8] sm:$0xff]
        %207 = vxpose.xlu0.b32.start [1/16] %v202, 128
        %208 = vxpose.xlu0.b32.cont [2/16] %v203, 128
        %209 = vxpose.xlu0.b32.cont [3/16] 0.0, 128
        %210 = vxpose.xlu0.b32.cont [4/16] 0.0, 128
        %211 = vxpose.xlu0.b32.cont [5/16] 0.0, 128
        %212 = vxpose.xlu0.b32.cont [6/16] 0.0, 128
        %213 = vxpose.xlu0.b32.cont [7/16] 0.0, 128
        %214 = vxpose.xlu0.b32.cont [8/16] 0.0, 128
        %215 = vxpose.xlu0.b32.cont [9/16] 0.0, 128
        %216 = vxpose.xlu0.b32.cont [10/16] 0.0, 128
        %217 = vxpose.xlu0.b32.cont [11/16] 0.0, 128
        %218 = vxpose.xlu0.b32.cont [12/16] 0.0, 128
        %219 = vxpose.xlu0.b32.cont [13/16] 0.0, 128
        %220 = vxpose.xlu0.b32.cont [14/16] 0.0, 128
        %221 = vxpose.xlu0.b32.cont [15/16] 0.0, 128
        %222 = vxpose.xlu0.b32.end [16/16] 0.0, 128
        %v223 = vpop.trf.xlu0
        %v224 = vpop.trf.xlu0
        %v225 = vpop.trf.xlu0
        %v226 = vpop.trf.xlu0
        %v227 = vpop.trf.xlu0
        %v228 = vpop.trf.xlu0
        %v229 = vpop.trf.xlu0
        %v230 = vpop.trf.xlu0
        %v231 = vpop.trf.xlu0
        %v232 = vpop.trf.xlu0
        %v233 = vpop.trf.xlu0
        %v234 = vpop.trf.xlu0
        %v235 = vpop.trf.xlu0
        %v236 = vpop.trf.xlu0
        %v237 = vpop.trf.xlu0
        %v238 = vpop.trf.xlu0
        %vm239 = vcmask 130048
        %v241 = vsel %vm239, %v223, 0
        %243 = vmatprep.subr.mxu0 0.0
        %244 = vmatpush1.msra.mxu0 %v205
        %245 = vmatprep.subr.mxu0 0.0
        %246 = vmatpush1.msra.mxu0 %v206
        %247 = vmatprep.subr.mxu0 0.0
        %248 = vmatpush1.msra.mxu0 0.0
        %249 = vmatprep.subr.mxu0 0.0
        %250 = vmatpush1.msra.mxu0 0.0
        %251 = vmatprep.subr.mxu0 0.0
        %252 = vmatpush1.msra.mxu0 0.0
        %253 = vmatprep.subr.mxu0 0.0
        %254 = vmatpush1.msra.mxu0 0.0
        %255 = vmatprep.subr.mxu0 0.0
        %256 = vmatpush1.msra.mxu0 0.0
        %257 = vmatprep.subr.mxu0 0.0
        %258 = vmatpush1.msra.mxu0 0.0
        %259 = vmatprep.subr.mxu0 0.0
        %260 = vmatpush1.msra.mxu0 0.0
        %261 = vmatprep.subr.mxu0 0.0
        %262 = vmatpush1.msra.mxu0 0.0
        %263 = vmatprep.subr.mxu0 0.0
        %264 = vmatpush1.msra.mxu0 0.0
        %265 = vmatprep.subr.mxu0 0.0
        %266 = vmatpush1.msra.mxu0 0.0
        %267 = vmatprep.subr.mxu0 0.0
        %268 = vmatpush1.msra.mxu0 0.0
        %269 = vmatprep.subr.mxu0 0.0
        %270 = vmatpush1.msra.mxu0 0.0
        %271 = vmatprep.subr.mxu0 0.0
        %272 = vmatpush1.msra.mxu0 0.0
        %273 = vmatprep.subr.mxu0 0.0
        %274 = vmatpush1.msra.mxu0 0.0
        %275 = vmatprep.subr.mxu0 0.0
        %276 = vmatpush1.msra.mxu0 0.0
        %277 = vmatprep.subr.mxu0 0.0
        %278 = vmatpush1.msra.mxu0 0.0
        %279 = vmatprep.subr.mxu0 0.0
        %280 = vmatpush1.msra.mxu0 0.0
        %281 = vmatprep.subr.mxu0 0.0
        %282 = vmatpush1.msra.mxu0 0.0
        %283 = vmatprep.subr.mxu0 0.0
        %284 = vmatpush1.msra.mxu0 0.0
        %285 = vmatprep.subr.mxu0 0.0
        %286 = vmatpush1.msra.mxu0 0.0
        %287 = vmatprep.subr.mxu0 0.0
        %288 = vmatpush1.msra.mxu0 0.0
        %289 = vmatprep.subr.mxu0 0.0
        %290 = vmatpush1.msra.mxu0 0.0
        %291 = vmatprep.subr.mxu0 0.0
        %292 = vmatpush1.msra.mxu0 0.0
        %293 = vmatprep.subr.mxu0 0.0
        %294 = vmatpush1.msra.mxu0 0.0
        %295 = vmatprep.subr.mxu0 0.0
        %296 = vmatpush1.msra.mxu0 0.0
        %297 = vmatprep.subr.mxu0 0.0
        %298 = vmatpush1.msra.mxu0 0.0
        %299 = vmatprep.subr.mxu0 0.0
        %300 = vmatpush1.msra.mxu0 0.0
        %301 = vmatprep.subr.mxu0 0.0
        %302 = vmatpush1.msra.mxu0 0.0
        %303 = vmatprep.subr.mxu0 0.0
        %304 = vmatpush1.msra.mxu0 0.0
        %305 = vmatprep.subr.mxu0 0.0
        %306 = vmatpush1.msra.mxu0 0.0
        %307 = vmatprep.mubr.f32.mxu0 0.0
        %308 = vmatmul.mubr.f32.gmra.mrb[0].mxu0 %v241
        %v309 = vpop.f32.mrb[0].mxu0
        %v310 = vadd.f32 0.0, %v309
        %v311 = vpop.f32.mrb[0].mxu0
        %312 = vdwg.mxu0
        %v313 = vadd.f32 %v204, %v310
        %vm314 = vcmask 523264
        %315 = vst.msk [vmem:[#allocation2] sm:$0xff] %vm314, %v313
        // Predicated region
        $region41: #{linformer_attention_forward.4} parent=27 // pred_check
          %p316 = pneg %p194
        $region42: #{linformer_attention_forward.4} parent=27 // pred_check_branch
          %318 = sbr.rel (%p316) target = $region44
        $region43: #{linformer_attention_forward.4} parent=27 // pred_region
          %v319 = vld [vmem:[#allocation2] sm:$0xff]
          %320 = vst.msk [vmem:[%s192] sm:$0xff] %vm314, %v319
        $region44: #{linformer_attention_forward.4} parent=27 // pred_fallthru
          _
        %s321 = sand.u32 %s89, 1
        %s322 = scalar_lea.sflag [#allocation5], %s321
        %s323 = sand.u32 %s89, 1
        %s324 = smul.addr %s323, 8
        %s325 = scalar_lea.vmem [#allocation8], %s324
        // Predicated region
        $region45: #{linformer_attention_forward.4} parent=27 // pred_check
          %p326 = pneg %p99
        $region46: #{linformer_attention_forward.4} parent=27 // pred_check_branch
          %328 = sbr.rel (%p326) target = $region48
        $region47: #{linformer_attention_forward.4} parent=27 // pred_region
          %s330 = ssub.s32 128, 128
          %331 = vsyncadd %s322, %s330
          %s332 = smul.addr %s24, 128
          %s333 = scalar_lea.hbm %s2, %s332
          %s335 = sshll.u32 %s325, 4
          %s336 = int_to_ptr.vmem [resolvable:$true] %s335
          %338 = dma.vmem_to_hbm [thread:$0]  %s336, 128, %s333, %s322
        $region48: #{linformer_attention_forward.4} parent=27 // pred_fallthru
          _
      $region28: #{linformer_attention_forward.4} parent=5 // pred_fallthru
        _
      %p339 = scmp.le.s32.totalorder 2, %s15
      // Predicated region
      $region49: #{linformer_attention_forward.4} parent=5 // pred_check
        %p340 = pneg %p339
      $region50: #{linformer_attention_forward.4} parent=5 // pred_check_branch
        %342 = sbr.rel (%p340) target = $region52
      $region51: #{linformer_attention_forward.4} parent=5 // pred_region
        %s343 = ssub.s32 %s15, 2
        // Predicated region
        $region53: #{linformer_attention_forward.4} parent=51 // pred_check
          %p344 = pneg %p105
        $region54: #{linformer_attention_forward.4} parent=51 // pred_check_branch
          %346 = sbr.rel (%p344) target = $region56
        $region55: #{linformer_attention_forward.4} parent=51 // pred_region
          %s347 = sand.u32 %s90, 1
          %s348 = scalar_lea.sflag [#allocation5], %s347
          %s349 = sand.u32 %s90, 1
          %s350 = smul.addr %s349, 8
          %s351 = scalar_lea.vmem [#allocation8], %s350
          %352 = dma.done %s348, 128
        $region56: #{linformer_attention_forward.4} parent=51 // pred_fallthru
          _
      $region52: #{linformer_attention_forward.4} parent=5 // pred_fallthru
        _
    $region6: #{linformer_attention_forward.4} parent=1 // loop_footer
      %s19 = sadd.s32 1, %s15
    $region7: #{linformer_attention_forward.4} parent=1 // loop_footer_branch
      %14 = sbr.rel target = $region3
    $region8: #{linformer_attention_forward.4} parent=1 // loop_exit
      _
    %353 = vsyncpa [#allocation4], 1
    %s354 = scalar_lea.sflag [#allocation4], 1
    %355 = vsyncpa %s354, 1
    %356 = vsyncpa [#allocation7], 1
    %s357 = scalar_lea.sflag [#allocation7], 1
    %358 = vsyncpa %s357, 1
    %359 = vsyncpa [#allocation5], 1
    %s360 = scalar_lea.sflag [#allocation5], 1
    %361 = vsyncpa %s360, 1

// kernel: linformer_attention_forward.3
$region0: #{linformer_attention_forward.3}
  #allocation0 [shape = 'u32[]', space=smem, size = 0x4, offset = 0x4, fixed_abs, tag = 'smem constant byte address 0x4 - core index']
  #allocation1 [shape = 'u32[144,128]{1,0:T(1,128)}', space=vmem, size = 0x12000, scoped, tag = 'internal scratch']
  %s0 = inlined_call_operand.hbm [shape: f32[32,32], index: 0, kind: input, shape index: {}]
  %s1 = inlined_call_operand.hbm [shape: f32[32,32], index: 1, kind: input, shape index: {}]
  %s2 = inlined_call_operand.hbm [shape: f32[32,64], index: 2, kind: input, shape index: {}]
  %s3 = inlined_call_operand.hbm [shape: f32[32,32], index: 3, kind: output, shape index: {0}]
  %s4 = inlined_call_operand.hbm [shape: f32[32,64], index: 4, kind: output, shape index: {1}]
  %5 = xla_tuple %s3, %s4
  %s6 = sld [smem:[#allocation0]]
  $region42: #{linformer_attention_forward.3} parent=0
    _
  %s8 = ssub.s32 1, %s6
  %s9 = scalar_select 0, %s8, %s6
  $region1: #{linformer_attention_forward.3} parent=0
    #allocation2 [shape = 'u8[16384]{0}', space=vmem, size = 0x4000, scoped, tag = 'input window, operand 0, single buffered']
    #allocation3 [shape = 's32[1]{0}', space=sflag, size = 0x4, scoped, tag = 'scoped memory for linformer_attention_forward.3']
    #allocation4 [shape = 's32[1]{0}', space=sflag, size = 0x4, scoped, tag = 'scoped memory for linformer_attention_forward.3']
    #allocation5 [shape = 'u8[16384]{0}', space=vmem, size = 0x4000, scoped, tag = 'input window, operand 1, single buffered']
    #allocation6 [shape = 's32[1]{0}', space=sflag, size = 0x4, scoped, tag = 'scoped memory for linformer_attention_forward.3']
    #allocation7 [shape = 'u8[16384]{0}', space=vmem, size = 0x4000, scoped, tag = 'input window, operand 2, single buffered']
    #allocation8 [shape = 'u8[16384]{0}', space=vmem, size = 0x4000, scoped, tag = 'output window, operand 0, single buffered']
    #allocation9 [shape = 'u8[16384]{0}', space=vmem, size = 0x4000, scoped, tag = 'output window, operand 1, single buffered']
    #allocation10 [shape = 's32[1]{0}', space=sflag, size = 0x4, scoped, tag = 'scoped memory for linformer_attention_forward.3']
    %10 = vsyncpa [#allocation3], 0
    %11 = vsyncpa [#allocation6], 0
    %12 = vsyncpa [#allocation4], 0
    %13 = vsyncpa [#allocation10], 0
    // Predicated region
    $region2: #{linformer_attention_forward.3} parent=1 // pred_check
      _
    $region3: #{linformer_attention_forward.3} parent=1 // pred_check_branch
      %15 = sbr.rel (0) target = $region5
    $region4: #{linformer_attention_forward.3} parent=1 // pred_region
      %s17 = ssub.s32 512, 512
      %18 = vsyncadd [#allocation3], %s17
      %s19 = sshll.u32 [#allocation2], 4
      %s20 = int_to_ptr.vmem [resolvable:$true] %s19
      %25 = dma.hbm_to_vmem [thread:$0]  %s0, 512, %s20, [#allocation3], 128, 128, 8
    $region5: #{linformer_attention_forward.3} parent=1 // pred_fallthru
      _
    // Predicated region
    $region6: #{linformer_attention_forward.3} parent=1 // pred_check
      _
    $region7: #{linformer_attention_forward.3} parent=1 // pred_check_branch
      %27 = sbr.rel (0) target = $region9
    $region8: #{linformer_attention_forward.3} parent=1 // pred_region
      %s29 = ssub.s32 512, 512
      %30 = vsyncadd [#allocation6], %s29
      %s31 = sshll.u32 [#allocation5], 4
      %s32 = int_to_ptr.vmem [resolvable:$true] %s31
      %37 = dma.hbm_to_vmem [thread:$0]  %s1, 512, %s32, [#allocation6], 128, 128, 8
    $region9: #{linformer_attention_forward.3} parent=1 // pred_fallthru
      _
    // Predicated region
    $region10: #{linformer_attention_forward.3} parent=1 // pred_check
      _
    $region11: #{linformer_attention_forward.3} parent=1 // pred_check_branch
      %39 = sbr.rel (0) target = $region13
    $region12: #{linformer_attention_forward.3} parent=1 // pred_region
      %s41 = ssub.s32 512, 512
      %42 = vsyncadd [#allocation6], %s41
      %s43 = sshll.u32 [#allocation7], 4
      %s44 = int_to_ptr.vmem [resolvable:$true] %s43
      %49 = dma.hbm_to_vmem [thread:$0]  %s2, 512, %s44, [#allocation6], 128, 128, 8
    $region13: #{linformer_attention_forward.3} parent=1 // pred_fallthru
      _
    // Predicated region
    $region14: #{linformer_attention_forward.3} parent=1 // pred_check
      _
    $region15: #{linformer_attention_forward.3} parent=1 // pred_check_branch
      %51 = sbr.rel (0) target = $region17
    $region16: #{linformer_attention_forward.3} parent=1 // pred_region
      %52 = dma.done [#allocation3], 512
    $region17: #{linformer_attention_forward.3} parent=1 // pred_fallthru
      _
    // Predicated region
    $region18: #{linformer_attention_forward.3} parent=1 // pred_check
      _
    $region19: #{linformer_attention_forward.3} parent=1 // pred_check_branch
      %54 = sbr.rel (0) target = $region21
    $region20: #{linformer_attention_forward.3} parent=1 // pred_region
      %55 = dma.done [#allocation6], 512
    $region21: #{linformer_attention_forward.3} parent=1 // pred_fallthru
      _
    // Predicated region
    $region22: #{linformer_attention_forward.3} parent=1 // pred_check
      _
    $region23: #{linformer_attention_forward.3} parent=1 // pred_check_branch
      %57 = sbr.rel (0) target = $region25
    $region24: #{linformer_attention_forward.3} parent=1 // pred_region
      %58 = dma.done [#allocation6], 512
    $region25: #{linformer_attention_forward.3} parent=1 // pred_fallthru
      _
    %v59 = vld [vmem:[#allocation2] sm:$0xff]
    %v60 = vld [vmem:[#allocation2 + $0x8] sm:$0xff]
    %v61 = vld [vmem:[#allocation2 + $0x10] sm:$0xff]
    %v62 = vld [vmem:[#allocation2 + $0x18] sm:$0xff]
    %v63 = vld [vmem:[#allocation5] sm:$0xff]
    %v64 = vld [vmem:[#allocation5 + $0x8] sm:$0xff]
    %v65 = vld [vmem:[#allocation5 + $0x10] sm:$0xff]
    %v66 = vld [vmem:[#allocation5 + $0x18] sm:$0xff]
    %vm67 = vcmask 261120
    %v69 = vsel %vm67, %v59, 0
    %v72 = vsel %vm67, %v60, 0
    %v75 = vsel %vm67, %v61, 0
    %v78 = vsel %vm67, %v62, 0
    %80 = vmatprep.subr.mxu0 0.0
    %81 = vmatpush1.msra.mxu0 %v63
    %82 = vmatprep.subr.mxu0 0.0
    %83 = vmatpush1.msra.mxu0 %v64
    %84 = vmatprep.subr.mxu0 0.0
    %85 = vmatpush1.msra.mxu0 %v65
    %86 = vmatprep.subr.mxu0 0.0
    %87 = vmatpush1.msra.mxu0 %v66
    %88 = vmatprep.subr.mxu0 0.0
    %89 = vmatpush1.msra.mxu0 0.0
    %90 = vmatprep.subr.mxu0 0.0
    %91 = vmatpush1.msra.mxu0 0.0
    %92 = vmatprep.subr.mxu0 0.0
    %93 = vmatpush1.msra.mxu0 0.0
    %94 = vmatprep.subr.mxu0 0.0
    %95 = vmatpush1.msra.mxu0 0.0
    %96 = vmatprep.subr.mxu0 0.0
    %97 = vmatpush1.msra.mxu0 0.0
    %98 = vmatprep.subr.mxu0 0.0
    %99 = vmatpush1.msra.mxu0 0.0
    %100 = vmatprep.subr.mxu0 0.0
    %101 = vmatpush1.msra.mxu0 0.0
    %102 = vmatprep.subr.mxu0 0.0
    %103 = vmatpush1.msra.mxu0 0.0
    %104 = vmatprep.subr.mxu0 0.0
    %105 = vmatpush1.msra.mxu0 0.0
    %106 = vmatprep.subr.mxu0 0.0
    %107 = vmatpush1.msra.mxu0 0.0
    %108 = vmatprep.subr.mxu0 0.0
    %109 = vmatpush1.msra.mxu0 0.0
    %110 = vmatprep.subr.mxu0 0.0
    %111 = vmatpush1.msra.mxu0 0.0
    %112 = vmatprep.subr.mxu0 0.0
    %113 = vmatpush1.msra.mxu0 0.0
    %114 = vmatprep.subr.mxu0 0.0
    %115 = vmatpush1.msra.mxu0 0.0
    %116 = vmatprep.subr.mxu0 0.0
    %117 = vmatpush1.msra.mxu0 0.0
    %118 = vmatprep.subr.mxu0 0.0
    %119 = vmatpush1.msra.mxu0 0.0
    %120 = vmatprep.subr.mxu0 0.0
    %121 = vmatpush1.msra.mxu0 0.0
    %122 = vmatprep.subr.mxu0 0.0
    %123 = vmatpush1.msra.mxu0 0.0
    %124 = vmatprep.subr.mxu0 0.0
    %125 = vmatpush1.msra.mxu0 0.0
    %126 = vmatprep.subr.mxu0 0.0
    %127 = vmatpush1.msra.mxu0 0.0
    %128 = vmatprep.subr.mxu0 0.0
    %129 = vmatpush1.msra.mxu0 0.0
    %130 = vmatprep.subr.mxu0 0.0
    %131 = vmatpush1.msra.mxu0 0.0
    %132 = vmatprep.subr.mxu0 0.0
    %133 = vmatpush1.msra.mxu0 0.0
    %134 = vmatprep.subr.mxu0 0.0
    %135 = vmatpush1.msra.mxu0 0.0
    %136 = vmatprep.subr.mxu0 0.0
    %137 = vmatpush1.msra.mxu0 0.0
    %138 = vmatprep.subr.mxu0 0.0
    %139 = vmatpush1.msra.mxu0 0.0
    %140 = vmatprep.subr.mxu0 0.0
    %141 = vmatpush1.msra.mxu0 0.0
    %142 = vmatprep.subr.mxu0 0.0
    %143 = vmatpush1.msra.mxu0 0.0
    %144 = vmatprep.mubr.f32.mxu0 0.0
    %145 = vmatmul.mubr.f32.gmra.mrb[0].mxu0 %v69
    %v146 = vpop.f32.mrb[0].mxu0
    %v147 = vadd.f32 0.0, %v146
    %v148 = vpop.f32.mrb[0].mxu0
    %149 = vmatprep.mubr.f32.mxu0 0.0
    %150 = vmatmul.mubr.f32.gmra.mrb[0].mxu0 %v72
    %v151 = vpop.f32.mrb[0].mxu0
    %v152 = vadd.f32 0.0, %v151
    %v153 = vpop.f32.mrb[0].mxu0
    %154 = vmatprep.mubr.f32.mxu0 0.0
    %155 = vmatmul.mubr.f32.gmra.mrb[0].mxu0 %v75
    %v156 = vpop.f32.mrb[0].mxu0
    %v157 = vadd.f32 0.0, %v156
    %v158 = vpop.f32.mrb[0].mxu0
    %159 = vmatprep.mubr.f32.mxu0 0.0
    %160 = vmatmul.mubr.f32.gmra.mrb[0].mxu0 %v78
    %v161 = vpop.f32.mrb[0].mxu0
    %v162 = vadd.f32 0.0, %v161
    %v163 = vpop.f32.mrb[0].mxu0
    %164 = vdwg.mxu0
    %165 = vst.msk [vmem:[#allocation8] sm:$0xff] %vm67, %v147
    %166 = vst.msk [vmem:[#allocation8 + $0x8] sm:$0xff] %vm67, %v152
    %167 = vst.msk [vmem:[#allocation8 + $0x10] sm:$0xff] %vm67, %v157
    %168 = vst.msk [vmem:[#allocation8 + $0x18] sm:$0xff] %vm67, %v162
    %v169 = vld [vmem:[#allocation7] sm:$0xff]
    %v170 = vld [vmem:[#allocation7 + $0x8] sm:$0xff]
    %v171 = vld [vmem:[#allocation7 + $0x10] sm:$0xff]
    %v172 = vld [vmem:[#allocation7 + $0x18] sm:$0xff]
    %173 = vmatprep.subr.mxu0 0.0
    %174 = vmatpush1.msra.mxu0 %v169
    %175 = vmatprep.subr.mxu0 0.0
    %176 = vmatpush1.msra.mxu0 %v170
    %177 = vmatprep.subr.mxu0 0.0
    %178 = vmatpush1.msra.mxu0 %v171
    %179 = vmatprep.subr.mxu0 0.0
    %180 = vmatpush1.msra.mxu0 %v172
    %181 = vmatprep.subr.mxu0 0.0
    %182 = vmatpush1.msra.mxu0 0.0
    %183 = vmatprep.subr.mxu0 0.0
    %184 = vmatpush1.msra.mxu0 0.0
    %185 = vmatprep.subr.mxu0 0.0
    %186 = vmatpush1.msra.mxu0 0.0
    %187 = vmatprep.subr.mxu0 0.0
    %188 = vmatpush1.msra.mxu0 0.0
    %189 = vmatprep.subr.mxu0 0.0
    %190 = vmatpush1.msra.mxu0 0.0
    %191 = vmatprep.subr.mxu0 0.0
    %192 = vmatpush1.msra.mxu0 0.0
    %193 = vmatprep.subr.mxu0 0.0
    %194 = vmatpush1.msra.mxu0 0.0
    %195 = vmatprep.subr.mxu0 0.0
    %196 = vmatpush1.msra.mxu0 0.0
    %197 = vmatprep.subr.mxu0 0.0
    %198 = vmatpush1.msra.mxu0 0.0
    %199 = vmatprep.subr.mxu0 0.0
    %200 = vmatpush1.msra.mxu0 0.0
    %201 = vmatprep.subr.mxu0 0.0
    %202 = vmatpush1.msra.mxu0 0.0
    %203 = vmatprep.subr.mxu0 0.0
    %204 = vmatpush1.msra.mxu0 0.0
    %205 = vmatprep.subr.mxu0 0.0
    %206 = vmatpush1.msra.mxu0 0.0
    %207 = vmatprep.subr.mxu0 0.0
    %208 = vmatpush1.msra.mxu0 0.0
    %209 = vmatprep.subr.mxu0 0.0
    %210 = vmatpush1.msra.mxu0 0.0
    %211 = vmatprep.subr.mxu0 0.0
    %212 = vmatpush1.msra.mxu0 0.0
    %213 = vmatprep.subr.mxu0 0.0
    %214 = vmatpush1.msra.mxu0 0.0
    %215 = vmatprep.subr.mxu0 0.0
    %216 = vmatpush1.msra.mxu0 0.0
    %217 = vmatprep.subr.mxu0 0.0
    %218 = vmatpush1.msra.mxu0 0.0
    %219 = vmatprep.subr.mxu0 0.0
    %220 = vmatpush1.msra.mxu0 0.0
    %221 = vmatprep.subr.mxu0 0.0
    %222 = vmatpush1.msra.mxu0 0.0
    %223 = vmatprep.subr.mxu0 0.0
    %224 = vmatpush1.msra.mxu0 0.0
    %225 = vmatprep.subr.mxu0 0.0
    %226 = vmatpush1.msra.mxu0 0.0
    %227 = vmatprep.subr.mxu0 0.0
    %228 = vmatpush1.msra.mxu0 0.0
    %229 = vmatprep.subr.mxu0 0.0
    %230 = vmatpush1.msra.mxu0 0.0
    %231 = vmatprep.subr.mxu0 0.0
    %232 = vmatpush1.msra.mxu0 0.0
    %233 = vmatprep.subr.mxu0 0.0
    %234 = vmatpush1.msra.mxu0 0.0
    %235 = vmatprep.subr.mxu0 0.0
    %236 = vmatpush1.msra.mxu0 0.0
    %237 = vmatprep.mubr.f32.mxu0 0.0
    %238 = vmatmul.mubr.f32.gmra.mrb[0].mxu0 %v69
    %v239 = vpop.f32.mrb[0].mxu0
    %v240 = vadd.f32 0.0, %v239
    %v241 = vpop.f32.mrb[0].mxu0
    %242 = vmatprep.mubr.f32.mxu0 0.0
    %243 = vmatmul.mubr.f32.gmra.mrb[0].mxu0 %v72
    %v244 = vpop.f32.mrb[0].mxu0
    %v245 = vadd.f32 0.0, %v244
    %v246 = vpop.f32.mrb[0].mxu0
    %247 = vmatprep.mubr.f32.mxu0 0.0
    %248 = vmatmul.mubr.f32.gmra.mrb[0].mxu0 %v75
    %v249 = vpop.f32.mrb[0].mxu0
    %v250 = vadd.f32 0.0, %v249
    %v251 = vpop.f32.mrb[0].mxu0
    %252 = vmatprep.mubr.f32.mxu0 0.0
    %253 = vmatmul.mubr.f32.gmra.mrb[0].mxu0 %v78
    %v254 = vpop.f32.mrb[0].mxu0
    %v255 = vadd.f32 0.0, %v254
    %v256 = vpop.f32.mrb[0].mxu0
    %257 = vdwg.mxu0
    %vm258 = vcmask 523264
    %259 = vst.msk [vmem:[#allocation9] sm:$0xff] %vm258, %v240
    %260 = vst.msk [vmem:[#allocation9 + $0x8] sm:$0xff] %vm258, %v245
    %261 = vst.msk [vmem:[#allocation9 + $0x10] sm:$0xff] %vm258, %v250
    %262 = vst.msk [vmem:[#allocation9 + $0x18] sm:$0xff] %vm258, %v255
    // Predicated region
    $region26: #{linformer_attention_forward.3} parent=1 // pred_check
      _
    $region27: #{linformer_attention_forward.3} parent=1 // pred_check_branch
      %264 = sbr.rel (0) target = $region29
    $region28: #{linformer_attention_forward.3} parent=1 // pred_region
      %s266 = ssub.s32 512, 512
      %267 = vsyncadd [#allocation4], %s266
      %s268 = sshll.u32 [#allocation8], 4
      %s269 = int_to_ptr.vmem [resolvable:$true] %s268
      %274 = dma.vmem_to_hbm [thread:$0]  %s269, 512, %s3, [#allocation4], 128, 128, 8
    $region29: #{linformer_attention_forward.3} parent=1 // pred_fallthru
      _
    // Predicated region
    $region30: #{linformer_attention_forward.3} parent=1 // pred_check
      _
    $region31: #{linformer_attention_forward.3} parent=1 // pred_check_branch
      %276 = sbr.rel (0) target = $region33
    $region32: #{linformer_attention_forward.3} parent=1 // pred_region
      %s278 = ssub.s32 512, 512
      %279 = vsyncadd [#allocation10], %s278
      %s280 = sshll.u32 [#allocation9], 4
      %s281 = int_to_ptr.vmem [resolvable:$true] %s280
      %286 = dma.vmem_to_hbm [thread:$0]  %s281, 512, %s4, [#allocation10], 128, 128, 8
    $region33: #{linformer_attention_forward.3} parent=1 // pred_fallthru
      _
    // Predicated region
    $region34: #{linformer_attention_forward.3} parent=1 // pred_check
      _
    $region35: #{linformer_attention_forward.3} parent=1 // pred_check_branch
      %288 = sbr.rel (0) target = $region37
    $region36: #{linformer_attention_forward.3} parent=1 // pred_region
      %289 = dma.done [#allocation4], 512
    $region37: #{linformer_attention_forward.3} parent=1 // pred_fallthru
      _
    // Predicated region
    $region38: #{linformer_attention_forward.3} parent=1 // pred_check
      _
    $region39: #{linformer_attention_forward.3} parent=1 // pred_check_branch
      %291 = sbr.rel (0) target = $region41
    $region40: #{linformer_attention_forward.3} parent=1 // pred_region
      %292 = dma.done [#allocation10], 512
    $region41: #{linformer_attention_forward.3} parent=1 // pred_fallthru
      _
    %293 = vsyncpa [#allocation3], 1
    %294 = vsyncpa [#allocation6], 1
    %295 = vsyncpa [#allocation4], 1
    %296 = vsyncpa [#allocation10], 1

// kernel: linformer_attention_forward.5
$region0: #{linformer_attention_forward.5}
  #allocation0 [shape = 'u32[]', space=smem, size = 0x4, offset = 0x4, fixed_abs, tag = 'smem constant byte address 0x4 - core index']
  #allocation1 [shape = 'u32[144,128]{1,0:T(1,128)}', space=vmem, size = 0x12000, scoped, tag = 'internal scratch']
  %s0 = inlined_call_operand.hbm [shape: f32[2,16,32], index: 0, kind: input, shape index: {}]
  %s1 = inlined_call_operand.hbm [shape: f32[2,4,8,8], index: 1, kind: input, shape index: {}]
  %s2 = inlined_call_operand.hbm [shape: f32[2,4,8,8], index: 2, kind: input, shape index: {}]
  %s3 = inlined_call_operand.hbm [shape: f32[32,32], index: 3, kind: input, shape index: {}]
  %s4 = inlined_call_operand.hbm [shape: f32[2,16,32], index: 4, kind: output, shape index: {}]
  %s5 = sld [smem:[#allocation0]]
  $region65: #{linformer_attention_forward.5} parent=0
    _
  %s7 = ssub.s32 1, %s5
  %s8 = scalar_select 0, %s7, %s5
  $region1: #{linformer_attention_forward.5} parent=0
    #allocation2 [shape = 'u8[16384]{0}', space=vmem, size = 0x4000, scoped, tag = 'input window, operand 0']
    #allocation3 [shape = 's32[2]{0}', space=sflag, size = 0x8, scoped, tag = 'scoped memory for linformer_attention_forward.5']
    #allocation4 [shape = 's32[2]{0}', space=sflag, size = 0x8, scoped, tag = 'scoped memory for linformer_attention_forward.5']
    #allocation5 [shape = 'u8[32768]{0}', space=vmem, size = 0x8000, scoped, tag = 'input window, operand 1']
    #allocation6 [shape = 's32[2]{0}', space=sflag, size = 0x8, scoped, tag = 'scoped memory for linformer_attention_forward.5']
    #allocation7 [shape = 'u8[32768]{0}', space=vmem, size = 0x8000, scoped, tag = 'input window, operand 2']
    #allocation8 [shape = 'u8[16384]{0}', space=vmem, size = 0x4000, scoped, tag = 'input window, operand 3, single buffered']
    #allocation9 [shape = 's32[1]{0}', space=sflag, size = 0x4, scoped, tag = 'scoped memory for linformer_attention_forward.5']
    #allocation10 [shape = 'u8[16384]{0}', space=vmem, size = 0x4000, scoped, tag = 'output window, operand 0']
    %9 = vsyncpa [#allocation3], 0
    %s10 = scalar_lea.sflag [#allocation3], 1
    %11 = vsyncpa %s10, 0
    %12 = vsyncpa [#allocation6], 0
    %s13 = scalar_lea.sflag [#allocation6], 1
    %14 = vsyncpa %s13, 0
    %15 = vsyncpa [#allocation9], 0
    %16 = vsyncpa [#allocation4], 0
    %s17 = scalar_lea.sflag [#allocation4], 1
    %18 = vsyncpa %s17, 0
    loop: start=0, step=1, limit=4
    $region2: #{linformer_attention_forward.5} parent=1 // loop_pre_header
      _
    $region3: #{linformer_attention_forward.5} parent=1 // loop_header
      %s20 = sphi 0, %s24
      %p21 = scmp.ge.s32.totalorder %s20, 4
      %s27 = sphi 0, %s39
      %s28 = sphi 0, %s35
      %s29 = sphi 0, %s27
      %s30 = sphi 0, %s28
      %s31 = sphi 0, %s29
      %s32 = sphi 0, %s30
      %s44 = sphi 0, %s46
      %s47 = sphi 0, %s44
      %s48 = sphi 0, %s47
      %s64 = sphi 0, %s48
      %s70 = sphi 0, %s72
      %s73 = sphi 0, %s70
      %s74 = sphi 0, %s73
      %s90 = sphi 0, %s74
      %s96 = sphi 0, %s98
      %s99 = sphi 0, %s96
      %s100 = sphi 0, %s99
      %s116 = sphi 0, %s100
      %s120 = sphi 0, %s120
      %s122 = sphi 0, %s120
      %s123 = sphi 0, %s122
      %s137 = sphi 0, %s123
      %s145 = sphi 0, %s147
      %s148 = sphi 0, %s145
      %s149 = sphi 0, %s148
      %s165 = sphi 0, %s149
    $region4: #{linformer_attention_forward.5} parent=1 // loop_header_branch
      %23 = sbr.rel (%p21) target = $region8
    $region5: #{linformer_attention_forward.5} parent=1 // loop_body
      %s25 = ssub.s32 %s20, 1
      %s26 = ssub.s32 %s20, 2
      %s33 = sadd.s32 1, %s28
      %p34 = scmp.ge.s32.totalorder %s33, 1
      %s35 = scalar_select %p34, 0, %s33
      %s36 = sadd.s32 1, %s27
      %s37 = scalar_select %p34, %s36, %s27
      %p38 = scmp.ge.s32.totalorder %s37, 2
      %s39 = scalar_select %p38, 0, %s37
      %s40 = ssub.s32 %s27, %s39
      %s41 = ssub.s32 %s28, %s35
      %s42 = sor.u32 %s40, %s41
      %p43 = scmp.eq.s32.totalorder %s42, 0
      %s45 = sadd.s32 %s44, 1
      %s46 = scalar_select %p43, %s44, %s45
      %p49 = pneg %p43
      %p50 = scmp.eq.s32.totalorder %s20, 1
      %p51 = por %p49, %p50
      %p52 = scmp.ne.s32.totalorder %s44, %s47
      %p53 = scmp.eq.s32.totalorder %s20, 0
      %p54 = por %p52, %p53
      %p55 = scmp.ne.s32.totalorder %s44, %s47
      %p56 = scmp.eq.s32.totalorder %s25, 1
      %p57 = por %p55, %p56
      %p58 = scmp.ne.s32.totalorder %s47, %s48
      %p59 = scmp.eq.s32.totalorder %s25, 0
      %p60 = por %p58, %p59
      %p61 = scmp.ne.s32.totalorder %s47, %s48
      %p62 = scmp.eq.s32.totalorder %s26, 1
      %p63 = por %p61, %p62
      %p65 = scmp.ne.s32.totalorder %s48, %s64
      %p66 = scmp.eq.s32.totalorder %s26, 0
      %p67 = por %p65, %p66
      %s68 = ssub.s32 %s27, %s39
      %p69 = scmp.eq.s32.totalorder %s68, 0
      %s71 = sadd.s32 %s70, 1
      %s72 = scalar_select %p69, %s70, %s71
      %p75 = pneg %p69
      %p76 = scmp.eq.s32.totalorder %s20, 1
      %p77 = por %p75, %p76
      %p78 = scmp.ne.s32.totalorder %s70, %s73
      %p79 = scmp.eq.s32.totalorder %s20, 0
      %p80 = por %p78, %p79
      %p81 = scmp.ne.s32.totalorder %s70, %s73
      %p82 = scmp.eq.s32.totalorder %s25, 1
      %p83 = por %p81, %p82
      %p84 = scmp.ne.s32.totalorder %s73, %s74
      %p85 = scmp.eq.s32.totalorder %s25, 0
      %p86 = por %p84, %p85
      %p87 = scmp.ne.s32.totalorder %s73, %s74
      %p88 = scmp.eq.s32.totalorder %s26, 1
      %p89 = por %p87, %p88
      %p91 = scmp.ne.s32.totalorder %s74, %s90
      %p92 = scmp.eq.s32.totalorder %s26, 0
      %p93 = por %p91, %p92
      %s94 = ssub.s32 %s27, %s39
      %p95 = scmp.eq.s32.totalorder %s94, 0
      %s97 = sadd.s32 %s96, 1
      %s98 = scalar_select %p95, %s96, %s97
      %p101 = pneg %p95
      %p102 = scmp.eq.s32.totalorder %s20, 1
      %p103 = por %p101, %p102
      %p104 = scmp.ne.s32.totalorder %s96, %s99
      %p105 = scmp.eq.s32.totalorder %s20, 0
      %p106 = por %p104, %p105
      %p107 = scmp.ne.s32.totalorder %s96, %s99
      %p108 = scmp.eq.s32.totalorder %s25, 1
      %p109 = por %p107, %p108
      %p110 = scmp.ne.s32.totalorder %s99, %s100
      %p111 = scmp.eq.s32.totalorder %s25, 0
      %p112 = por %p110, %p111
      %p113 = scmp.ne.s32.totalorder %s99, %s100
      %p114 = scmp.eq.s32.totalorder %s26, 1
      %p115 = por %p113, %p114
      %p117 = scmp.ne.s32.totalorder %s100, %s116
      %p118 = scmp.eq.s32.totalorder %s26, 0
      %p119 = por %p117, %p118
      %s121 = sadd.s32 %s120, 1
      %p124 = scmp.eq.s32.totalorder %s20, 1
      %p125 = scmp.ne.s32.totalorder %s120, %s122
      %p126 = scmp.eq.s32.totalorder %s20, 0
      %p127 = por %p125, %p126
      %p128 = scmp.ne.s32.totalorder %s120, %s122
      %p129 = scmp.eq.s32.totalorder %s25, 1
      %p130 = por %p128, %p129
      %p131 = scmp.ne.s32.totalorder %s122, %s123
      %p132 = scmp.eq.s32.totalorder %s25, 0
      %p133 = por %p131, %p132
      %p134 = scmp.ne.s32.totalorder %s122, %s123
      %p135 = scmp.eq.s32.totalorder %s26, 1
      %p136 = por %p134, %p135
      %p138 = scmp.ne.s32.totalorder %s123, %s137
      %p139 = scmp.eq.s32.totalorder %s26, 0
      %p140 = por %p138, %p139
      %s141 = ssub.s32 %s27, %s39
      %s142 = ssub.s32 %s28, %s35
      %s143 = sor.u32 %s141, %s142
      %p144 = scmp.eq.s32.totalorder %s143, 0
      %s146 = sadd.s32 %s145, 1
      %s147 = scalar_select %p144, %s145, %s146
      %p150 = pneg %p144
      %p151 = scmp.eq.s32.totalorder %s20, 1
      %p152 = por %p150, %p151
      %p153 = scmp.ne.s32.totalorder %s145, %s148
      %p154 = scmp.eq.s32.totalorder %s20, 0
      %p155 = por %p153, %p154
      %p156 = scmp.ne.s32.totalorder %s145, %s148
      %p157 = scmp.eq.s32.totalorder %s25, 1
      %p158 = por %p156, %p157
      %p159 = scmp.ne.s32.totalorder %s148, %s149
      %p160 = scmp.eq.s32.totalorder %s25, 0
      %p161 = por %p159, %p160
      %p162 = scmp.ne.s32.totalorder %s148, %s149
      %p163 = scmp.eq.s32.totalorder %s26, 1
      %p164 = por %p162, %p163
      %p166 = scmp.ne.s32.totalorder %s149, %s165
      %p167 = scmp.eq.s32.totalorder %s26, 0
      %p168 = por %p166, %p167
      %p169 = scmp.le.s32.totalorder 1, %s20
      %p170 = scmp.lt.s32.totalorder %s20, 3
      %p171 = pnand %p169, %p170
      %p172 = pneg %p171
      // Predicated region
      $region9: #{linformer_attention_forward.5} parent=5 // pred_check
        _
      $region10: #{linformer_attention_forward.5} parent=5 // pred_check_branch
        %174 = sbr.rel (%p171) target = $region12
      $region11: #{linformer_attention_forward.5} parent=5 // pred_region
        %s175 = ssub.s32 %s20, 1
        // Predicated region
        $region13: #{linformer_attention_forward.5} parent=11 // pred_check
          %p176 = pneg %p133
        $region14: #{linformer_attention_forward.5} parent=11 // pred_check_branch
          %178 = sbr.rel (%p176) target = $region16
        $region15: #{linformer_attention_forward.5} parent=11 // pred_region
          %s180 = ssub.s32 512, 512
          %181 = vsyncadd [#allocation9], %s180
          %s182 = sshll.u32 [#allocation8], 4
          %s183 = int_to_ptr.vmem [resolvable:$true] %s182
          %188 = dma.hbm_to_vmem [thread:$0]  %s3, 512, %s183, [#allocation9], 128, 128, 8
        $region16: #{linformer_attention_forward.5} parent=11 // pred_fallthru
          _
      $region12: #{linformer_attention_forward.5} parent=5 // pred_fallthru
        _
      %p189 = scmp.lt.s32.totalorder %s20, 2
      // Predicated region
      $region17: #{linformer_attention_forward.5} parent=5 // pred_check
        %p190 = pneg %p189
      $region18: #{linformer_attention_forward.5} parent=5 // pred_check_branch
        %192 = sbr.rel (%p190) target = $region20
      $region19: #{linformer_attention_forward.5} parent=5 // pred_region
        // Predicated region
        $region21: #{linformer_attention_forward.5} parent=19 // pred_check
          %p193 = pneg %p54
        $region22: #{linformer_attention_forward.5} parent=19 // pred_check_branch
          %195 = sbr.rel (%p193) target = $region24
        $region23: #{linformer_attention_forward.5} parent=19 // pred_region
          %s196 = sand.u32 %s44, 1
          %s197 = scalar_lea.sflag [#allocation3], %s196
          %s198 = sand.u32 %s44, 1
          %s199 = smul.addr %s198, 16
          %s200 = scalar_lea.vmem [#allocation2], %s199
          %s201 = smul.u32 2, %s28
          %s203 = ssub.s32 256, 256
          %204 = vsyncadd %s197, %s203
          %s205 = smul.addr %s27, 2
          %s206 = sadd.s32 %s201, %s205
          %s207 = smul.addr %s206, 128
          %s208 = scalar_lea.hbm %s0, %s207
          %s209 = sshll.u32 %s200, 4
          %s210 = int_to_ptr.vmem [resolvable:$true] %s209
          %215 = dma.hbm_to_vmem [thread:$0]  %s208, 256, %s210, %s197, 128, 128, 8
        $region24: #{linformer_attention_forward.5} parent=19 // pred_fallthru
          _
        // Predicated region
        $region25: #{linformer_attention_forward.5} parent=19 // pred_check
          %p216 = pneg %p80
        $region26: #{linformer_attention_forward.5} parent=19 // pred_check_branch
          %218 = sbr.rel (%p216) target = $region28
        $region27: #{linformer_attention_forward.5} parent=19 // pred_region
          %s219 = sand.u32 %s20, 1
          %s220 = scalar_lea.sflag [#allocation6], %s219
          %s221 = sand.u32 %s70, 1
          %s222 = smul.addr %s221, 32
          %s223 = scalar_lea.vmem [#allocation5], %s222
          %s225 = ssub.s32 512, 512
          %226 = vsyncadd %s220, %s225
          %s227 = smul.addr %s27, 4
          %s228 = smul.addr %s227, 128
          %s229 = scalar_lea.hbm %s1, %s228
          %s230 = sshll.u32 %s223, 4
          %s231 = int_to_ptr.vmem [resolvable:$true] %s230
          %236 = dma.hbm_to_vmem [thread:$0]  %s229, 512, %s231, %s220, 128, 128, 8
        $region28: #{linformer_attention_forward.5} parent=19 // pred_fallthru
          _
        // Predicated region
        $region29: #{linformer_attention_forward.5} parent=19 // pred_check
          %p237 = pneg %p106
        $region30: #{linformer_attention_forward.5} parent=19 // pred_check_branch
          %239 = sbr.rel (%p237) target = $region32
        $region31: #{linformer_attention_forward.5} parent=19 // pred_region
          %s240 = sand.u32 %s20, 1
          %s241 = scalar_lea.sflag [#allocation6], %s240
          %s242 = sand.u32 %s96, 1
          %s243 = smul.addr %s242, 32
          %s244 = scalar_lea.vmem [#allocation7], %s243
          %s246 = ssub.s32 512, 512
          %247 = vsyncadd %s241, %s246
          %s248 = smul.addr %s27, 4
          %s249 = smul.addr %s248, 128
          %s250 = scalar_lea.hbm %s2, %s249
          %s251 = sshll.u32 %s244, 4
          %s252 = int_to_ptr.vmem [resolvable:$true] %s251
          %257 = dma.hbm_to_vmem [thread:$0]  %s250, 512, %s252, %s241, 128, 128, 8
        $region32: #{linformer_attention_forward.5} parent=19 // pred_fallthru
          _
      $region20: #{linformer_attention_forward.5} parent=5 // pred_fallthru
        _
      %p258 = scmp.le.s32.totalorder 1, %s20
      %p259 = scmp.lt.s32.totalorder %s20, 3
      %p260 = pnand %p258, %p259
      %p261 = pneg %p260
      // Predicated region
      $region33: #{linformer_attention_forward.5} parent=5 // pred_check
        _
      $region34: #{linformer_attention_forward.5} parent=5 // pred_check_branch
        %263 = sbr.rel (%p260) target = $region36
      $region35: #{linformer_attention_forward.5} parent=5 // pred_region
        %s264 = ssub.s32 %s20, 1
        %s265 = sand.u32 %s47, 1
        %s266 = scalar_lea.sflag [#allocation3], %s265
        %s267 = sand.u32 %s47, 1
        %s268 = smul.addr %s267, 16
        %s269 = scalar_lea.vmem [#allocation2], %s268
        // Predicated region
        $region37: #{linformer_attention_forward.5} parent=35 // pred_check
          %p270 = pneg %p60
        $region38: #{linformer_attention_forward.5} parent=35 // pred_check_branch
          %272 = sbr.rel (%p270) target = $region40
        $region39: #{linformer_attention_forward.5} parent=35 // pred_region
          %273 = dma.done %s266, 256
        $region40: #{linformer_attention_forward.5} parent=35 // pred_fallthru
          _
        %s274 = sand.u32 %s25, 1
        %s275 = scalar_lea.sflag [#allocation6], %s274
        %s276 = sand.u32 %s73, 1
        %s277 = smul.addr %s276, 32
        %s278 = scalar_lea.vmem [#allocation5], %s277
        // Predicated region
        $region41: #{linformer_attention_forward.5} parent=35 // pred_check
          %p279 = pneg %p86
        $region42: #{linformer_attention_forward.5} parent=35 // pred_check_branch
          %281 = sbr.rel (%p279) target = $region44
        $region43: #{linformer_attention_forward.5} parent=35 // pred_region
          %282 = dma.done %s275, 512
        $region44: #{linformer_attention_forward.5} parent=35 // pred_fallthru
          _
        %s283 = sand.u32 %s25, 1
        %s284 = scalar_lea.sflag [#allocation6], %s283
        %s285 = sand.u32 %s99, 1
        %s286 = smul.addr %s285, 32
        %s287 = scalar_lea.vmem [#allocation7], %s286
        // Predicated region
        $region45: #{linformer_attention_forward.5} parent=35 // pred_check
          %p288 = pneg %p112
        $region46: #{linformer_attention_forward.5} parent=35 // pred_check_branch
          %290 = sbr.rel (%p288) target = $region48
        $region47: #{linformer_attention_forward.5} parent=35 // pred_region
          %291 = dma.done %s284, 512
        $region48: #{linformer_attention_forward.5} parent=35 // pred_fallthru
          _
        // Predicated region
        $region49: #{linformer_attention_forward.5} parent=35 // pred_check
          %p292 = pneg %p133
        $region50: #{linformer_attention_forward.5} parent=35 // pred_check_branch
          %294 = sbr.rel (%p292) target = $region52
        $region51: #{linformer_attention_forward.5} parent=35 // pred_region
          %295 = dma.done [#allocation9], 512
        $region52: #{linformer_attention_forward.5} parent=35 // pred_fallthru
          _
        %s296 = sand.u32 %s47, 1
        %s297 = scalar_lea.sflag [#allocation3], %s296
        %s298 = sand.u32 %s47, 1
        %s299 = smul.addr %s298, 16
        %s300 = scalar_lea.vmem [#allocation2], %s299
        %p301 = pneg %p60
        %p302 = pneg %p57
        %s303 = sand.u32 %s25, 1
        %s304 = scalar_lea.sflag [#allocation6], %s303
        %s305 = sand.u32 %s73, 1
        %s306 = smul.addr %s305, 32
        %s307 = scalar_lea.vmem [#allocation5], %s306
        %p308 = pneg %p86
        %p309 = pneg %p83
        %s310 = sand.u32 %s25, 1
        %s311 = scalar_lea.sflag [#allocation6], %s310
        %s312 = sand.u32 %s99, 1
        %s313 = smul.addr %s312, 32
        %s314 = scalar_lea.vmem [#allocation7], %s313
        %p315 = pneg %p112
        %p316 = pneg %p109
        %p317 = pneg %p133
        %p318 = pneg %p130
        %p319 = pneg %p161
        %p320 = pneg %p158
        %s321 = sand.u32 %s148, 1
        %s322 = scalar_lea.sflag [#allocation4], %s321
        %s323 = sand.u32 %s148, 1
        %s324 = smul.addr %s323, 16
        %s325 = scalar_lea.vmem [#allocation10], %s324
        %s326 = smul.u32 2, %s30
        %s327 = smul.u32 2, %s30
        %v328 = vld [vmem:[%s269] sm:$0xff]
        %v329 = vld [vmem:[%s269 + $0x8] sm:$0xff]
        %v330 = vld [vmem:[%s278] sm:$0xff]
        %v331 = vld [vmem:[%s287] sm:$0xff]
        %vm332 = vcmask 64512
        %v334 = vsel %vm332, %v328, 0
        %v337 = vsel %vm332, %v329, 0
        %v340 = vsel %vm332, %v330, 0
        %342 = vmatprep.subr.mxu0 0.0
        %343 = vmatpush1.xpose.msra.mxu0 %v340
        %344 = vmatprep.subr.mxu0 0.0
        %345 = vmatpush1.xpose.msra.mxu0 0.0
        %346 = vmatprep.subr.mxu0 0.0
        %347 = vmatpush1.xpose.msra.mxu0 0.0
        %348 = vmatprep.subr.mxu0 0.0
        %349 = vmatpush1.xpose.msra.mxu0 0.0
        %350 = vmatprep.subr.mxu0 0.0
        %351 = vmatpush1.xpose.msra.mxu0 0.0
        %352 = vmatprep.subr.mxu0 0.0
        %353 = vmatpush1.xpose.msra.mxu0 0.0
        %354 = vmatprep.subr.mxu0 0.0
        %355 = vmatpush1.xpose.msra.mxu0 0.0
        %356 = vmatprep.subr.mxu0 0.0
        %357 = vmatpush1.xpose.msra.mxu0 0.0
        %358 = vmatprep.subr.mxu0 0.0
        %359 = vmatpush1.xpose.msra.mxu0 0.0
        %360 = vmatprep.subr.mxu0 0.0
        %361 = vmatpush1.xpose.msra.mxu0 0.0
        %362 = vmatprep.subr.mxu0 0.0
        %363 = vmatpush1.xpose.msra.mxu0 0.0
        %364 = vmatprep.subr.mxu0 0.0
        %365 = vmatpush1.xpose.msra.mxu0 0.0
        %366 = vmatprep.subr.mxu0 0.0
        %367 = vmatpush1.xpose.msra.mxu0 0.0
        %368 = vmatprep.subr.mxu0 0.0
        %369 = vmatpush1.xpose.msra.mxu0 0.0
        %370 = vmatprep.subr.mxu0 0.0
        %371 = vmatpush1.xpose.msra.mxu0 0.0
        %372 = vmatprep.subr.mxu0 0.0
        %373 = vmatpush1.xpose.msra.mxu0 0.0
        %374 = vmatprep.subr.mxu0 0.0
        %375 = vmatpush1.xpose.msra.mxu0 0.0
        %376 = vmatprep.subr.mxu0 0.0
        %377 = vmatpush1.xpose.msra.mxu0 0.0
        %378 = vmatprep.subr.mxu0 0.0
        %379 = vmatpush1.xpose.msra.mxu0 0.0
        %380 = vmatprep.subr.mxu0 0.0
        %381 = vmatpush1.xpose.msra.mxu0 0.0
        %382 = vmatprep.subr.mxu0 0.0
        %383 = vmatpush1.xpose.msra.mxu0 0.0
        %384 = vmatprep.subr.mxu0 0.0
        %385 = vmatpush1.xpose.msra.mxu0 0.0
        %386 = vmatprep.subr.mxu0 0.0
        %387 = vmatpush1.xpose.msra.mxu0 0.0
        %388 = vmatprep.subr.mxu0 0.0
        %389 = vmatpush1.xpose.msra.mxu0 0.0
        %390 = vmatprep.subr.mxu0 0.0
        %391 = vmatpush1.xpose.msra.mxu0 0.0
        %392 = vmatprep.subr.mxu0 0.0
        %393 = vmatpush1.xpose.msra.mxu0 0.0
        %394 = vmatprep.subr.mxu0 0.0
        %395 = vmatpush1.xpose.msra.mxu0 0.0
        %396 = vmatprep.subr.mxu0 0.0
        %397 = vmatpush1.xpose.msra.mxu0 0.0
        %398 = vmatprep.subr.mxu0 0.0
        %399 = vmatpush1.xpose.msra.mxu0 0.0
        %400 = vmatprep.subr.mxu0 0.0
        %401 = vmatpush1.xpose.msra.mxu0 0.0
        %402 = vmatprep.subr.mxu0 0.0
        %403 = vmatpush1.xpose.msra.mxu0 0.0
        %404 = vmatprep.subr.mxu0 0.0
        %405 = vmatpush1.xpose.msra.mxu0 0.0
        %406 = vmatprep.mubr.f32.mxu0 0.0
        %407 = vmatmul.mubr.f32.gmra.mrb[0].mxu0 %v334
        %v408 = vpop.f32.mrb[0].mxu0
        %v409 = vadd.f32 0.0, %v408
        %v410 = vpop.f32.mrb[0].mxu0
        %411 = vmatprep.mubr.f32.mxu0 0.0
        %412 = vmatmul.mubr.f32.gmra.mrb[0].mxu0 %v337
        %v413 = vpop.f32.mrb[0].mxu0
        %v414 = vadd.f32 0.0, %v413
        %v415 = vpop.f32.mrb[0].mxu0
        %416 = vdwg.mxu0
        %v417 = vsel %vm332, %v409, -inf
        %418 = vmax.xlane.f32.xlu0 %v417
        %v419 = vpop.xlane.xlu0 %418
        %v420 = vsel %vm332, %v414, -inf
        %421 = vmax.xlane.f32.xlu0 %v420
        %v422 = vpop.xlane.xlu0 %421
        %v423 = vsub.f32 %v409, %v419
        %v424 = vsub.f32 %v414, %v422
        %v425 = vmul.f32 %v423, 1.442695
        %v426 = vpow.pop %v425
        %v427 = vmul.f32 %v424, 1.442695
        %v428 = vpow.pop %v427
        %v429 = vsel %vm332, %v426, 0.0
        %430 = vadd.xlane.f32.xlu0 %v429
        %v431 = vpop.xlane.xlu0 %430
        %v432 = vsel %vm332, %v428, 0.0
        %433 = vadd.xlane.f32.xlu0 %v432
        %v434 = vpop.xlane.xlu0 %433
        %v435 = vrcp.pop %v431
        %v436 = vrcp.pop %v434
        %v437 = vmul.f32 %v426, %v435
        %v438 = vmul.f32 %v428, %v436
        %v440 = vsel %vm332, %v437, 0
        %v443 = vsel %vm332, %v438, 0
        %445 = vmatprep.subr.mxu0 0.0
        %446 = vmatpush1.msra.mxu0 %v331
        %447 = vmatprep.subr.mxu0 0.0
        %448 = vmatpush1.msra.mxu0 0.0
        %449 = vmatprep.subr.mxu0 0.0
        %450 = vmatpush1.msra.mxu0 0.0
        %451 = vmatprep.subr.mxu0 0.0
        %452 = vmatpush1.msra.mxu0 0.0
        %453 = vmatprep.subr.mxu0 0.0
        %454 = vmatpush1.msra.mxu0 0.0
        %455 = vmatprep.subr.mxu0 0.0
        %456 = vmatpush1.msra.mxu0 0.0
        %457 = vmatprep.subr.mxu0 0.0
        %458 = vmatpush1.msra.mxu0 0.0
        %459 = vmatprep.subr.mxu0 0.0
        %460 = vmatpush1.msra.mxu0 0.0
        %461 = vmatprep.subr.mxu0 0.0
        %462 = vmatpush1.msra.mxu0 0.0
        %463 = vmatprep.subr.mxu0 0.0
        %464 = vmatpush1.msra.mxu0 0.0
        %465 = vmatprep.subr.mxu0 0.0
        %466 = vmatpush1.msra.mxu0 0.0
        %467 = vmatprep.subr.mxu0 0.0
        %468 = vmatpush1.msra.mxu0 0.0
        %469 = vmatprep.subr.mxu0 0.0
        %470 = vmatpush1.msra.mxu0 0.0
        %471 = vmatprep.subr.mxu0 0.0
        %472 = vmatpush1.msra.mxu0 0.0
        %473 = vmatprep.subr.mxu0 0.0
        %474 = vmatpush1.msra.mxu0 0.0
        %475 = vmatprep.subr.mxu0 0.0
        %476 = vmatpush1.msra.mxu0 0.0
        %477 = vmatprep.subr.mxu0 0.0
        %478 = vmatpush1.msra.mxu0 0.0
        %479 = vmatprep.subr.mxu0 0.0
        %480 = vmatpush1.msra.mxu0 0.0
        %481 = vmatprep.subr.mxu0 0.0
        %482 = vmatpush1.msra.mxu0 0.0
        %483 = vmatprep.subr.mxu0 0.0
        %484 = vmatpush1.msra.mxu0 0.0
        %485 = vmatprep.subr.mxu0 0.0
        %486 = vmatpush1.msra.mxu0 0.0
        %487 = vmatprep.subr.mxu0 0.0
        %488 = vmatpush1.msra.mxu0 0.0
        %489 = vmatprep.subr.mxu0 0.0
        %490 = vmatpush1.msra.mxu0 0.0
        %491 = vmatprep.subr.mxu0 0.0
        %492 = vmatpush1.msra.mxu0 0.0
        %493 = vmatprep.subr.mxu0 0.0
        %494 = vmatpush1.msra.mxu0 0.0
        %495 = vmatprep.subr.mxu0 0.0
        %496 = vmatpush1.msra.mxu0 0.0
        %497 = vmatprep.subr.mxu0 0.0
        %498 = vmatpush1.msra.mxu0 0.0
        %499 = vmatprep.subr.mxu0 0.0
        %500 = vmatpush1.msra.mxu0 0.0
        %501 = vmatprep.subr.mxu0 0.0
        %502 = vmatpush1.msra.mxu0 0.0
        %503 = vmatprep.subr.mxu0 0.0
        %504 = vmatpush1.msra.mxu0 0.0
        %505 = vmatprep.subr.mxu0 0.0
        %506 = vmatpush1.msra.mxu0 0.0
        %507 = vmatprep.subr.mxu0 0.0
        %508 = vmatpush1.msra.mxu0 0.0
        %509 = vmatprep.mubr.f32.mxu0 0.0
        %510 = vmatmul.mubr.f32.gmra.mrb[0].mxu0 %v440
        %v511 = vpop.f32.mrb[0].mxu0
        %v512 = vadd.f32 0.0, %v511
        %v513 = vpop.f32.mrb[0].mxu0
        %514 = vmatprep.mubr.f32.mxu0 0.0
        %515 = vmatmul.mubr.f32.gmra.mrb[0].mxu0 %v443
        %v516 = vpop.f32.mrb[0].mxu0
        %v517 = vadd.f32 0.0, %v516
        %v518 = vpop.f32.mrb[0].mxu0
        %519 = vdwg.mxu0
        %s520 = scalar_lea.vmem %s278, 8 [#allocation5]
        %v521 = vld [vmem:[%s520] sm:$0xff]
        %s522 = scalar_lea.vmem %s287, 8 [#allocation7]
        %v523 = vld [vmem:[%s522] sm:$0xff]
        %524 = vrot.lane.b32.xlu0 %v328, 120
        %v525 = vpop.permute.xlu0 %524
        %526 = vrot.lane.b32.xlu0 %v329, 120
        %v527 = vpop.permute.xlu0 %526
        %v528 = vsel %vm332, %v525, 0
        %v530 = vsel %vm332, %v527, 0
        %v533 = vsel %vm332, %v521, 0
        %535 = vmatprep.subr.mxu0 0.0
        %536 = vmatpush1.xpose.msra.mxu0 %v533
        %537 = vmatprep.subr.mxu0 0.0
        %538 = vmatpush1.xpose.msra.mxu0 0.0
        %539 = vmatprep.subr.mxu0 0.0
        %540 = vmatpush1.xpose.msra.mxu0 0.0
        %541 = vmatprep.subr.mxu0 0.0
        %542 = vmatpush1.xpose.msra.mxu0 0.0
        %543 = vmatprep.subr.mxu0 0.0
        %544 = vmatpush1.xpose.msra.mxu0 0.0
        %545 = vmatprep.subr.mxu0 0.0
        %546 = vmatpush1.xpose.msra.mxu0 0.0
        %547 = vmatprep.subr.mxu0 0.0
        %548 = vmatpush1.xpose.msra.mxu0 0.0
        %549 = vmatprep.subr.mxu0 0.0
        %550 = vmatpush1.xpose.msra.mxu0 0.0
        %551 = vmatprep.subr.mxu0 0.0
        %552 = vmatpush1.xpose.msra.mxu0 0.0
        %553 = vmatprep.subr.mxu0 0.0
        %554 = vmatpush1.xpose.msra.mxu0 0.0
        %555 = vmatprep.subr.mxu0 0.0
        %556 = vmatpush1.xpose.msra.mxu0 0.0
        %557 = vmatprep.subr.mxu0 0.0
        %558 = vmatpush1.xpose.msra.mxu0 0.0
        %559 = vmatprep.subr.mxu0 0.0
        %560 = vmatpush1.xpose.msra.mxu0 0.0
        %561 = vmatprep.subr.mxu0 0.0
        %562 = vmatpush1.xpose.msra.mxu0 0.0
        %563 = vmatprep.subr.mxu0 0.0
        %564 = vmatpush1.xpose.msra.mxu0 0.0
        %565 = vmatprep.subr.mxu0 0.0
        %566 = vmatpush1.xpose.msra.mxu0 0.0
        %567 = vmatprep.subr.mxu0 0.0
        %568 = vmatpush1.xpose.msra.mxu0 0.0
        %569 = vmatprep.subr.mxu0 0.0
        %570 = vmatpush1.xpose.msra.mxu0 0.0
        %571 = vmatprep.subr.mxu0 0.0
        %572 = vmatpush1.xpose.msra.mxu0 0.0
        %573 = vmatprep.subr.mxu0 0.0
        %574 = vmatpush1.xpose.msra.mxu0 0.0
        %575 = vmatprep.subr.mxu0 0.0
        %576 = vmatpush1.xpose.msra.mxu0 0.0
        %577 = vmatprep.subr.mxu0 0.0
        %578 = vmatpush1.xpose.msra.mxu0 0.0
        %579 = vmatprep.subr.mxu0 0.0
        %580 = vmatpush1.xpose.msra.mxu0 0.0
        %581 = vmatprep.subr.mxu0 0.0
        %582 = vmatpush1.xpose.msra.mxu0 0.0
        %583 = vmatprep.subr.mxu0 0.0
        %584 = vmatpush1.xpose.msra.mxu0 0.0
        %585 = vmatprep.subr.mxu0 0.0
        %586 = vmatpush1.xpose.msra.mxu0 0.0
        %587 = vmatprep.subr.mxu0 0.0
        %588 = vmatpush1.xpose.msra.mxu0 0.0
        %589 = vmatprep.subr.mxu0 0.0
        %590 = vmatpush1.xpose.msra.mxu0 0.0
        %591 = vmatprep.subr.mxu0 0.0
        %592 = vmatpush1.xpose.msra.mxu0 0.0
        %593 = vmatprep.subr.mxu0 0.0
        %594 = vmatpush1.xpose.msra.mxu0 0.0
        %595 = vmatprep.subr.mxu0 0.0
        %596 = vmatpush1.xpose.msra.mxu0 0.0
        %597 = vmatprep.subr.mxu0 0.0
        %598 = vmatpush1.xpose.msra.mxu0 0.0
        %599 = vmatprep.mubr.f32.mxu0 0.0
        %600 = vmatmul.mubr.f32.gmra.mrb[0].mxu0 %v528
        %v601 = vpop.f32.mrb[0].mxu0
        %v602 = vadd.f32 0.0, %v601
        %v603 = vpop.f32.mrb[0].mxu0
        %604 = vmatprep.mubr.f32.mxu0 0.0
        %605 = vmatmul.mubr.f32.gmra.mrb[0].mxu0 %v530
        %v606 = vpop.f32.mrb[0].mxu0
        %v607 = vadd.f32 0.0, %v606
        %v608 = vpop.f32.mrb[0].mxu0
        %609 = vdwg.mxu0
        %v610 = vsel %vm332, %v602, -inf
        %611 = vmax.xlane.f32.xlu0 %v610
        %v612 = vpop.xlane.xlu0 %611
        %v613 = vsel %vm332, %v607, -inf
        %614 = vmax.xlane.f32.xlu0 %v613
        %v615 = vpop.xlane.xlu0 %614
        %v616 = vsub.f32 %v602, %v612
        %v617 = vsub.f32 %v607, %v615
        %v618 = vmul.f32 %v616, 1.442695
        %v619 = vpow.pop %v618
        %v620 = vmul.f32 %v617, 1.442695
        %v621 = vpow.pop %v620
        %v622 = vsel %vm332, %v619, 0.0
        %623 = vadd.xlane.f32.xlu0 %v622
        %v624 = vpop.xlane.xlu0 %623
        %v625 = vsel %vm332, %v621, 0.0
        %626 = vadd.xlane.f32.xlu0 %v625
        %v627 = vpop.xlane.xlu0 %626
        %v628 = vrcp.pop %v624
        %v629 = vrcp.pop %v627
        %v630 = vmul.f32 %v619, %v628
        %v631 = vmul.f32 %v621, %v629
        %v633 = vsel %vm332, %v630, 0
        %v636 = vsel %vm332, %v631, 0
        %638 = vmatprep.subr.mxu0 0.0
        %639 = vmatpush1.msra.mxu0 %v523
        %640 = vmatprep.subr.mxu0 0.0
        %641 = vmatpush1.msra.mxu0 0.0
        %642 = vmatprep.subr.mxu0 0.0
        %643 = vmatpush1.msra.mxu0 0.0
        %644 = vmatprep.subr.mxu0 0.0
        %645 = vmatpush1.msra.mxu0 0.0
        %646 = vmatprep.subr.mxu0 0.0
        %647 = vmatpush1.msra.mxu0 0.0
        %648 = vmatprep.subr.mxu0 0.0
        %649 = vmatpush1.msra.mxu0 0.0
        %650 = vmatprep.subr.mxu0 0.0
        %651 = vmatpush1.msra.mxu0 0.0
        %652 = vmatprep.subr.mxu0 0.0
        %653 = vmatpush1.msra.mxu0 0.0
        %654 = vmatprep.subr.mxu0 0.0
        %655 = vmatpush1.msra.mxu0 0.0
        %656 = vmatprep.subr.mxu0 0.0
        %657 = vmatpush1.msra.mxu0 0.0
        %658 = vmatprep.subr.mxu0 0.0
        %659 = vmatpush1.msra.mxu0 0.0
        %660 = vmatprep.subr.mxu0 0.0
        %661 = vmatpush1.msra.mxu0 0.0
        %662 = vmatprep.subr.mxu0 0.0
        %663 = vmatpush1.msra.mxu0 0.0
        %664 = vmatprep.subr.mxu0 0.0
        %665 = vmatpush1.msra.mxu0 0.0
        %666 = vmatprep.subr.mxu0 0.0
        %667 = vmatpush1.msra.mxu0 0.0
        %668 = vmatprep.subr.mxu0 0.0
        %669 = vmatpush1.msra.mxu0 0.0
        %670 = vmatprep.subr.mxu0 0.0
        %671 = vmatpush1.msra.mxu0 0.0
        %672 = vmatprep.subr.mxu0 0.0
        %673 = vmatpush1.msra.mxu0 0.0
        %674 = vmatprep.subr.mxu0 0.0
        %675 = vmatpush1.msra.mxu0 0.0
        %676 = vmatprep.subr.mxu0 0.0
        %677 = vmatpush1.msra.mxu0 0.0
        %678 = vmatprep.subr.mxu0 0.0
        %679 = vmatpush1.msra.mxu0 0.0
        %680 = vmatprep.subr.mxu0 0.0
        %681 = vmatpush1.msra.mxu0 0.0
        %682 = vmatprep.subr.mxu0 0.0
        %683 = vmatpush1.msra.mxu0 0.0
        %684 = vmatprep.subr.mxu0 0.0
        %685 = vmatpush1.msra.mxu0 0.0
        %686 = vmatprep.subr.mxu0 0.0
        %687 = vmatpush1.msra.mxu0 0.0
        %688 = vmatprep.subr.mxu0 0.0
        %689 = vmatpush1.msra.mxu0 0.0
        %690 = vmatprep.subr.mxu0 0.0
        %691 = vmatpush1.msra.mxu0 0.0
        %692 = vmatprep.subr.mxu0 0.0
        %693 = vmatpush1.msra.mxu0 0.0
        %694 = vmatprep.subr.mxu0 0.0
        %695 = vmatpush1.msra.mxu0 0.0
        %696 = vmatprep.subr.mxu0 0.0
        %697 = vmatpush1.msra.mxu0 0.0
        %698 = vmatprep.subr.mxu0 0.0
        %699 = vmatpush1.msra.mxu0 0.0
        %700 = vmatprep.subr.mxu0 0.0
        %701 = vmatpush1.msra.mxu0 0.0
        %702 = vmatprep.mubr.f32.mxu0 0.0
        %703 = vmatmul.mubr.f32.gmra.mrb[0].mxu0 %v633
        %v704 = vpop.f32.mrb[0].mxu0
        %v705 = vadd.f32 0.0, %v704
        %v706 = vpop.f32.mrb[0].mxu0
        %707 = vmatprep.mubr.f32.mxu0 0.0
        %708 = vmatmul.mubr.f32.gmra.mrb[0].mxu0 %v636
        %v709 = vpop.f32.mrb[0].mxu0
        %v710 = vadd.f32 0.0, %v709
        %v711 = vpop.f32.mrb[0].mxu0
        %712 = vdwg.mxu0
        %s713 = scalar_lea.vmem %s278, 16 [#allocation5]
        %v714 = vld [vmem:[%s713] sm:$0xff]
        %s715 = scalar_lea.vmem %s287, 16 [#allocation7]
        %v716 = vld [vmem:[%s715] sm:$0xff]
        %717 = vrot.lane.b32.xlu0 %v328, 112
        %v718 = vpop.permute.xlu0 %717
        %719 = vrot.lane.b32.xlu0 %v329, 112
        %v720 = vpop.permute.xlu0 %719
        %v721 = vsel %vm332, %v718, 0
        %v723 = vsel %vm332, %v720, 0
        %v726 = vsel %vm332, %v714, 0
        %728 = vmatprep.subr.mxu0 0.0
        %729 = vmatpush1.xpose.msra.mxu0 %v726
        %730 = vmatprep.subr.mxu0 0.0
        %731 = vmatpush1.xpose.msra.mxu0 0.0
        %732 = vmatprep.subr.mxu0 0.0
        %733 = vmatpush1.xpose.msra.mxu0 0.0
        %734 = vmatprep.subr.mxu0 0.0
        %735 = vmatpush1.xpose.msra.mxu0 0.0
        %736 = vmatprep.subr.mxu0 0.0
        %737 = vmatpush1.xpose.msra.mxu0 0.0
        %738 = vmatprep.subr.mxu0 0.0
        %739 = vmatpush1.xpose.msra.mxu0 0.0
        %740 = vmatprep.subr.mxu0 0.0
        %741 = vmatpush1.xpose.msra.mxu0 0.0
        %742 = vmatprep.subr.mxu0 0.0
        %743 = vmatpush1.xpose.msra.mxu0 0.0
        %744 = vmatprep.subr.mxu0 0.0
        %745 = vmatpush1.xpose.msra.mxu0 0.0
        %746 = vmatprep.subr.mxu0 0.0
        %747 = vmatpush1.xpose.msra.mxu0 0.0
        %748 = vmatprep.subr.mxu0 0.0
        %749 = vmatpush1.xpose.msra.mxu0 0.0
        %750 = vmatprep.subr.mxu0 0.0
        %751 = vmatpush1.xpose.msra.mxu0 0.0
        %752 = vmatprep.subr.mxu0 0.0
        %753 = vmatpush1.xpose.msra.mxu0 0.0
        %754 = vmatprep.subr.mxu0 0.0
        %755 = vmatpush1.xpose.msra.mxu0 0.0
        %756 = vmatprep.subr.mxu0 0.0
        %757 = vmatpush1.xpose.msra.mxu0 0.0
        %758 = vmatprep.subr.mxu0 0.0
        %759 = vmatpush1.xpose.msra.mxu0 0.0
        %760 = vmatprep.subr.mxu0 0.0
        %761 = vmatpush1.xpose.msra.mxu0 0.0
        %762 = vmatprep.subr.mxu0 0.0
        %763 = vmatpush1.xpose.msra.mxu0 0.0
        %764 = vmatprep.subr.mxu0 0.0
        %765 = vmatpush1.xpose.msra.mxu0 0.0
        %766 = vmatprep.subr.mxu0 0.0
        %767 = vmatpush1.xpose.msra.mxu0 0.0
        %768 = vmatprep.subr.mxu0 0.0
        %769 = vmatpush1.xpose.msra.mxu0 0.0
        %770 = vmatprep.subr.mxu0 0.0
        %771 = vmatpush1.xpose.msra.mxu0 0.0
        %772 = vmatprep.subr.mxu0 0.0
        %773 = vmatpush1.xpose.msra.mxu0 0.0
        %774 = vmatprep.subr.mxu0 0.0
        %775 = vmatpush1.xpose.msra.mxu0 0.0
        %776 = vmatprep.subr.mxu0 0.0
        %777 = vmatpush1.xpose.msra.mxu0 0.0
        %778 = vmatprep.subr.mxu0 0.0
        %779 = vmatpush1.xpose.msra.mxu0 0.0
        %780 = vmatprep.subr.mxu0 0.0
        %781 = vmatpush1.xpose.msra.mxu0 0.0
        %782 = vmatprep.subr.mxu0 0.0
        %783 = vmatpush1.xpose.msra.mxu0 0.0
        %784 = vmatprep.subr.mxu0 0.0
        %785 = vmatpush1.xpose.msra.mxu0 0.0
        %786 = vmatprep.subr.mxu0 0.0
        %787 = vmatpush1.xpose.msra.mxu0 0.0
        %788 = vmatprep.subr.mxu0 0.0
        %789 = vmatpush1.xpose.msra.mxu0 0.0
        %790 = vmatprep.subr.mxu0 0.0
        %791 = vmatpush1.xpose.msra.mxu0 0.0
        %792 = vmatprep.mubr.f32.mxu0 0.0
        %793 = vmatmul.mubr.f32.gmra.mrb[0].mxu0 %v721
        %v794 = vpop.f32.mrb[0].mxu0
        %v795 = vadd.f32 0.0, %v794
        %v796 = vpop.f32.mrb[0].mxu0
        %797 = vmatprep.mubr.f32.mxu0 0.0
        %798 = vmatmul.mubr.f32.gmra.mrb[0].mxu0 %v723
        %v799 = vpop.f32.mrb[0].mxu0
        %v800 = vadd.f32 0.0, %v799
        %v801 = vpop.f32.mrb[0].mxu0
        %802 = vdwg.mxu0
        %v803 = vsel %vm332, %v795, -inf
        %804 = vmax.xlane.f32.xlu0 %v803
        %v805 = vpop.xlane.xlu0 %804
        %v806 = vsel %vm332, %v800, -inf
        %807 = vmax.xlane.f32.xlu0 %v806
        %v808 = vpop.xlane.xlu0 %807
        %v809 = vsub.f32 %v795, %v805
        %v810 = vsub.f32 %v800, %v808
        %v811 = vmul.f32 %v809, 1.442695
        %v812 = vpow.pop %v811
        %v813 = vmul.f32 %v810, 1.442695
        %v814 = vpow.pop %v813
        %v815 = vsel %vm332, %v812, 0.0
        %816 = vadd.xlane.f32.xlu0 %v815
        %v817 = vpop.xlane.xlu0 %816
        %v818 = vsel %vm332, %v814, 0.0
        %819 = vadd.xlane.f32.xlu0 %v818
        %v820 = vpop.xlane.xlu0 %819
        %v821 = vrcp.pop %v817
        %v822 = vrcp.pop %v820
        %v823 = vmul.f32 %v812, %v821
        %v824 = vmul.f32 %v814, %v822
        %v826 = vsel %vm332, %v823, 0
        %v829 = vsel %vm332, %v824, 0
        %831 = vmatprep.subr.mxu0 0.0
        %832 = vmatpush1.msra.mxu0 %v716
        %833 = vmatprep.subr.mxu0 0.0
        %834 = vmatpush1.msra.mxu0 0.0
        %835 = vmatprep.subr.mxu0 0.0
        %836 = vmatpush1.msra.mxu0 0.0
        %837 = vmatprep.subr.mxu0 0.0
        %838 = vmatpush1.msra.mxu0 0.0
        %839 = vmatprep.subr.mxu0 0.0
        %840 = vmatpush1.msra.mxu0 0.0
        %841 = vmatprep.subr.mxu0 0.0
        %842 = vmatpush1.msra.mxu0 0.0
        %843 = vmatprep.subr.mxu0 0.0
        %844 = vmatpush1.msra.mxu0 0.0
        %845 = vmatprep.subr.mxu0 0.0
        %846 = vmatpush1.msra.mxu0 0.0
        %847 = vmatprep.subr.mxu0 0.0
        %848 = vmatpush1.msra.mxu0 0.0
        %849 = vmatprep.subr.mxu0 0.0
        %850 = vmatpush1.msra.mxu0 0.0
        %851 = vmatprep.subr.mxu0 0.0
        %852 = vmatpush1.msra.mxu0 0.0
        %853 = vmatprep.subr.mxu0 0.0
        %854 = vmatpush1.msra.mxu0 0.0
        %855 = vmatprep.subr.mxu0 0.0
        %856 = vmatpush1.msra.mxu0 0.0
        %857 = vmatprep.subr.mxu0 0.0
        %858 = vmatpush1.msra.mxu0 0.0
        %859 = vmatprep.subr.mxu0 0.0
        %860 = vmatpush1.msra.mxu0 0.0
        %861 = vmatprep.subr.mxu0 0.0
        %862 = vmatpush1.msra.mxu0 0.0
        %863 = vmatprep.subr.mxu0 0.0
        %864 = vmatpush1.msra.mxu0 0.0
        %865 = vmatprep.subr.mxu0 0.0
        %866 = vmatpush1.msra.mxu0 0.0
        %867 = vmatprep.subr.mxu0 0.0
        %868 = vmatpush1.msra.mxu0 0.0
        %869 = vmatprep.subr.mxu0 0.0
        %870 = vmatpush1.msra.mxu0 0.0
        %871 = vmatprep.subr.mxu0 0.0
        %872 = vmatpush1.msra.mxu0 0.0
        %873 = vmatprep.subr.mxu0 0.0
        %874 = vmatpush1.msra.mxu0 0.0
        %875 = vmatprep.subr.mxu0 0.0
        %876 = vmatpush1.msra.mxu0 0.0
        %877 = vmatprep.subr.mxu0 0.0
        %878 = vmatpush1.msra.mxu0 0.0
        %879 = vmatprep.subr.mxu0 0.0
        %880 = vmatpush1.msra.mxu0 0.0
        %881 = vmatprep.subr.mxu0 0.0
        %882 = vmatpush1.msra.mxu0 0.0
        %883 = vmatprep.subr.mxu0 0.0
        %884 = vmatpush1.msra.mxu0 0.0
        %885 = vmatprep.subr.mxu0 0.0
        %886 = vmatpush1.msra.mxu0 0.0
        %887 = vmatprep.subr.mxu0 0.0
        %888 = vmatpush1.msra.mxu0 0.0
        %889 = vmatprep.subr.mxu0 0.0
        %890 = vmatpush1.msra.mxu0 0.0
        %891 = vmatprep.subr.mxu0 0.0
        %892 = vmatpush1.msra.mxu0 0.0
        %893 = vmatprep.subr.mxu0 0.0
        %894 = vmatpush1.msra.mxu0 0.0
        %895 = vmatprep.mubr.f32.mxu0 0.0
        %896 = vmatmul.mubr.f32.gmra.mrb[0].mxu0 %v826
        %v897 = vpop.f32.mrb[0].mxu0
        %v898 = vadd.f32 0.0, %v897
        %v899 = vpop.f32.mrb[0].mxu0
        %900 = vmatprep.mubr.f32.mxu0 0.0
        %901 = vmatmul.mubr.f32.gmra.mrb[0].mxu0 %v829
        %v902 = vpop.f32.mrb[0].mxu0
        %v903 = vadd.f32 0.0, %v902
        %v904 = vpop.f32.mrb[0].mxu0
        %905 = vdwg.mxu0
        %s906 = scalar_lea.vmem %s278, 24 [#allocation5]
        %v907 = vld [vmem:[%s906] sm:$0xff]
        %s908 = scalar_lea.vmem %s287, 24 [#allocation7]
        %v909 = vld [vmem:[%s908] sm:$0xff]
        %910 = vrot.lane.b32.xlu0 %v328, 104
        %v911 = vpop.permute.xlu0 %910
        %912 = vrot.lane.b32.xlu0 %v329, 104
        %v913 = vpop.permute.xlu0 %912
        %v914 = vsel %vm332, %v911, 0
        %v916 = vsel %vm332, %v913, 0
        %v919 = vsel %vm332, %v907, 0
        %921 = vmatprep.subr.mxu0 0.0
        %922 = vmatpush1.xpose.msra.mxu0 %v919
        %923 = vmatprep.subr.mxu0 0.0
        %924 = vmatpush1.xpose.msra.mxu0 0.0
        %925 = vmatprep.subr.mxu0 0.0
        %926 = vmatpush1.xpose.msra.mxu0 0.0
        %927 = vmatprep.subr.mxu0 0.0
        %928 = vmatpush1.xpose.msra.mxu0 0.0
        %929 = vmatprep.subr.mxu0 0.0
        %930 = vmatpush1.xpose.msra.mxu0 0.0
        %931 = vmatprep.subr.mxu0 0.0
        %932 = vmatpush1.xpose.msra.mxu0 0.0
        %933 = vmatprep.subr.mxu0 0.0
        %934 = vmatpush1.xpose.msra.mxu0 0.0
        %935 = vmatprep.subr.mxu0 0.0
        %936 = vmatpush1.xpose.msra.mxu0 0.0
        %937 = vmatprep.subr.mxu0 0.0
        %938 = vmatpush1.xpose.msra.mxu0 0.0
        %939 = vmatprep.subr.mxu0 0.0
        %940 = vmatpush1.xpose.msra.mxu0 0.0
        %941 = vmatprep.subr.mxu0 0.0
        %942 = vmatpush1.xpose.msra.mxu0 0.0
        %943 = vmatprep.subr.mxu0 0.0
        %944 = vmatpush1.xpose.msra.mxu0 0.0
        %945 = vmatprep.subr.mxu0 0.0
        %946 = vmatpush1.xpose.msra.mxu0 0.0
        %947 = vmatprep.subr.mxu0 0.0
        %948 = vmatpush1.xpose.msra.mxu0 0.0
        %949 = vmatprep.subr.mxu0 0.0
        %950 = vmatpush1.xpose.msra.mxu0 0.0
        %951 = vmatprep.subr.mxu0 0.0
        %952 = vmatpush1.xpose.msra.mxu0 0.0
        %953 = vmatprep.subr.mxu0 0.0
        %954 = vmatpush1.xpose.msra.mxu0 0.0
        %955 = vmatprep.subr.mxu0 0.0
        %956 = vmatpush1.xpose.msra.mxu0 0.0
        %957 = vmatprep.subr.mxu0 0.0
        %958 = vmatpush1.xpose.msra.mxu0 0.0
        %959 = vmatprep.subr.mxu0 0.0
        %960 = vmatpush1.xpose.msra.mxu0 0.0
        %961 = vmatprep.subr.mxu0 0.0
        %962 = vmatpush1.xpose.msra.mxu0 0.0
        %963 = vmatprep.subr.mxu0 0.0
        %964 = vmatpush1.xpose.msra.mxu0 0.0
        %965 = vmatprep.subr.mxu0 0.0
        %966 = vmatpush1.xpose.msra.mxu0 0.0
        %967 = vmatprep.subr.mxu0 0.0
        %968 = vmatpush1.xpose.msra.mxu0 0.0
        %969 = vmatprep.subr.mxu0 0.0
        %970 = vmatpush1.xpose.msra.mxu0 0.0
        %971 = vmatprep.subr.mxu0 0.0
        %972 = vmatpush1.xpose.msra.mxu0 0.0
        %973 = vmatprep.subr.mxu0 0.0
        %974 = vmatpush1.xpose.msra.mxu0 0.0
        %975 = vmatprep.subr.mxu0 0.0
        %976 = vmatpush1.xpose.msra.mxu0 0.0
        %977 = vmatprep.subr.mxu0 0.0
        %978 = vmatpush1.xpose.msra.mxu0 0.0
        %979 = vmatprep.subr.mxu0 0.0
        %980 = vmatpush1.xpose.msra.mxu0 0.0
        %981 = vmatprep.subr.mxu0 0.0
        %982 = vmatpush1.xpose.msra.mxu0 0.0
        %983 = vmatprep.subr.mxu0 0.0
        %984 = vmatpush1.xpose.msra.mxu0 0.0
        %985 = vmatprep.mubr.f32.mxu0 0.0
        %986 = vmatmul.mubr.f32.gmra.mrb[0].mxu0 %v914
        %v987 = vpop.f32.mrb[0].mxu0
        %v988 = vadd.f32 0.0, %v987
        %v989 = vpop.f32.mrb[0].mxu0
        %990 = vmatprep.mubr.f32.mxu0 0.0
        %991 = vmatmul.mubr.f32.gmra.mrb[0].mxu0 %v916
        %v992 = vpop.f32.mrb[0].mxu0
        %v993 = vadd.f32 0.0, %v992
        %v994 = vpop.f32.mrb[0].mxu0
        %995 = vdwg.mxu0
        %v996 = vsel %vm332, %v988, -inf
        %997 = vmax.xlane.f32.xlu0 %v996
        %v998 = vpop.xlane.xlu0 %997
        %v999 = vsel %vm332, %v993, -inf
        %1000 = vmax.xlane.f32.xlu0 %v999
        %v1001 = vpop.xlane.xlu0 %1000
        %v1002 = vsub.f32 %v988, %v998
        %v1003 = vsub.f32 %v993, %v1001
        %v1004 = vmul.f32 %v1002, 1.442695
        %v1005 = vpow.pop %v1004
        %v1006 = vmul.f32 %v1003, 1.442695
        %v1007 = vpow.pop %v1006
        %v1008 = vsel %vm332, %v1005, 0.0
        %1009 = vadd.xlane.f32.xlu0 %v1008
        %v1010 = vpop.xlane.xlu0 %1009
        %v1011 = vsel %vm332, %v1007, 0.0
        %1012 = vadd.xlane.f32.xlu0 %v1011
        %v1013 = vpop.xlane.xlu0 %1012
        %v1014 = vrcp.pop %v1010
        %v1015 = vrcp.pop %v1013
        %v1016 = vmul.f32 %v1005, %v1014
        %v1017 = vmul.f32 %v1007, %v1015
        %v1019 = vsel %vm332, %v1016, 0
        %v1022 = vsel %vm332, %v1017, 0
        %1024 = vmatprep.subr.mxu0 0.0
        %1025 = vmatpush1.msra.mxu0 %v909
        %1026 = vmatprep.subr.mxu0 0.0
        %1027 = vmatpush1.msra.mxu0 0.0
        %1028 = vmatprep.subr.mxu0 0.0
        %1029 = vmatpush1.msra.mxu0 0.0
        %1030 = vmatprep.subr.mxu0 0.0
        %1031 = vmatpush1.msra.mxu0 0.0
        %1032 = vmatprep.subr.mxu0 0.0
        %1033 = vmatpush1.msra.mxu0 0.0
        %1034 = vmatprep.subr.mxu0 0.0
        %1035 = vmatpush1.msra.mxu0 0.0
        %1036 = vmatprep.subr.mxu0 0.0
        %1037 = vmatpush1.msra.mxu0 0.0
        %1038 = vmatprep.subr.mxu0 0.0
        %1039 = vmatpush1.msra.mxu0 0.0
        %1040 = vmatprep.subr.mxu0 0.0
        %1041 = vmatpush1.msra.mxu0 0.0
        %1042 = vmatprep.subr.mxu0 0.0
        %1043 = vmatpush1.msra.mxu0 0.0
        %1044 = vmatprep.subr.mxu0 0.0
        %1045 = vmatpush1.msra.mxu0 0.0
        %1046 = vmatprep.subr.mxu0 0.0
        %1047 = vmatpush1.msra.mxu0 0.0
        %1048 = vmatprep.subr.mxu0 0.0
        %1049 = vmatpush1.msra.mxu0 0.0
        %1050 = vmatprep.subr.mxu0 0.0
        %1051 = vmatpush1.msra.mxu0 0.0
        %1052 = vmatprep.subr.mxu0 0.0
        %1053 = vmatpush1.msra.mxu0 0.0
        %1054 = vmatprep.subr.mxu0 0.0
        %1055 = vmatpush1.msra.mxu0 0.0
        %1056 = vmatprep.subr.mxu0 0.0
        %1057 = vmatpush1.msra.mxu0 0.0
        %1058 = vmatprep.subr.mxu0 0.0
        %1059 = vmatpush1.msra.mxu0 0.0
        %1060 = vmatprep.subr.mxu0 0.0
        %1061 = vmatpush1.msra.mxu0 0.0
        %1062 = vmatprep.subr.mxu0 0.0
        %1063 = vmatpush1.msra.mxu0 0.0
        %1064 = vmatprep.subr.mxu0 0.0
        %1065 = vmatpush1.msra.mxu0 0.0
        %1066 = vmatprep.subr.mxu0 0.0
        %1067 = vmatpush1.msra.mxu0 0.0
        %1068 = vmatprep.subr.mxu0 0.0
        %1069 = vmatpush1.msra.mxu0 0.0
        %1070 = vmatprep.subr.mxu0 0.0
        %1071 = vmatpush1.msra.mxu0 0.0
        %1072 = vmatprep.subr.mxu0 0.0
        %1073 = vmatpush1.msra.mxu0 0.0
        %1074 = vmatprep.subr.mxu0 0.0
        %1075 = vmatpush1.msra.mxu0 0.0
        %1076 = vmatprep.subr.mxu0 0.0
        %1077 = vmatpush1.msra.mxu0 0.0
        %1078 = vmatprep.subr.mxu0 0.0
        %1079 = vmatpush1.msra.mxu0 0.0
        %1080 = vmatprep.subr.mxu0 0.0
        %1081 = vmatpush1.msra.mxu0 0.0
        %1082 = vmatprep.subr.mxu0 0.0
        %1083 = vmatpush1.msra.mxu0 0.0
        %1084 = vmatprep.subr.mxu0 0.0
        %1085 = vmatpush1.msra.mxu0 0.0
        %1086 = vmatprep.subr.mxu0 0.0
        %1087 = vmatpush1.msra.mxu0 0.0
        %1088 = vmatprep.mubr.f32.mxu0 0.0
        %1089 = vmatmul.mubr.f32.gmra.mrb[0].mxu0 %v1019
        %v1090 = vpop.f32.mrb[0].mxu0
        %v1091 = vadd.f32 0.0, %v1090
        %v1092 = vpop.f32.mrb[0].mxu0
        %1093 = vmatprep.mubr.f32.mxu0 0.0
        %1094 = vmatmul.mubr.f32.gmra.mrb[0].mxu0 %v1022
        %v1095 = vpop.f32.mrb[0].mxu0
        %v1096 = vadd.f32 0.0, %v1095
        %v1097 = vpop.f32.mrb[0].mxu0
        %1098 = vdwg.mxu0
        %1101 = vrot.lane.b32.xlu0 %v705, 8
        %v1102 = vpop.permute.xlu0 %1101
        %1103 = vrot.lane.b32.xlu0 %v710, 8
        %v1104 = vpop.permute.xlu0 %1103
        %1109 = vrot.lane.b32.xlu0 %v898, 16
        %v1110 = vpop.permute.xlu0 %1109
        %1111 = vrot.lane.b32.xlu0 %v903, 16
        %v1112 = vpop.permute.xlu0 %1111
        %1117 = vrot.lane.b32.xlu0 %v1091, 24
        %v1118 = vpop.permute.xlu0 %1117
        %1119 = vrot.lane.b32.xlu0 %v1096, 24
        %v1120 = vpop.permute.xlu0 %1119
        %v1123 = vsel %vm332, %v512, %v1102
        %v1124 = vsel %vm332, %v517, %v1104
        %vm1125 = vcmask 130048
        %v1126 = vsel %vm1125, %v1123, %v1110
        %v1127 = vsel %vm1125, %v1124, %v1112
        %vm1128 = vcmask 195584
        %v1129 = vsel %vm1128, %v1126, %v1118
        %v1130 = vsel %vm1128, %v1127, %v1120
        %v1131 = vld [vmem:[#allocation8] sm:$0xff]
        %v1132 = vld [vmem:[#allocation8 + $0x8] sm:$0xff]
        %v1133 = vld [vmem:[#allocation8 + $0x10] sm:$0xff]
        %v1134 = vld [vmem:[#allocation8 + $0x18] sm:$0xff]
        %vm1135 = vcmask 261120
        %v1137 = vsel %vm1135, %v1129, 0
        %v1140 = vsel %vm1135, %v1130, 0
        %1142 = vmatprep.subr.mxu0 0.0
        %1143 = vmatpush1.msra.mxu0 %v1131
        %1144 = vmatprep.subr.mxu0 0.0
        %1145 = vmatpush1.msra.mxu0 %v1132
        %1146 = vmatprep.subr.mxu0 0.0
        %1147 = vmatpush1.msra.mxu0 %v1133
        %1148 = vmatprep.subr.mxu0 0.0
        %1149 = vmatpush1.msra.mxu0 %v1134
        %1150 = vmatprep.subr.mxu0 0.0
        %1151 = vmatpush1.msra.mxu0 0.0
        %1152 = vmatprep.subr.mxu0 0.0
        %1153 = vmatpush1.msra.mxu0 0.0
        %1154 = vmatprep.subr.mxu0 0.0
        %1155 = vmatpush1.msra.mxu0 0.0
        %1156 = vmatprep.subr.mxu0 0.0
        %1157 = vmatpush1.msra.mxu0 0.0
        %1158 = vmatprep.subr.mxu0 0.0
        %1159 = vmatpush1.msra.mxu0 0.0
        %1160 = vmatprep.subr.mxu0 0.0
        %1161 = vmatpush1.msra.mxu0 0.0
        %1162 = vmatprep.subr.mxu0 0.0
        %1163 = vmatpush1.msra.mxu0 0.0
        %1164 = vmatprep.subr.mxu0 0.0
        %1165 = vmatpush1.msra.mxu0 0.0
        %1166 = vmatprep.subr.mxu0 0.0
        %1167 = vmatpush1.msra.mxu0 0.0
        %1168 = vmatprep.subr.mxu0 0.0
        %1169 = vmatpush1.msra.mxu0 0.0
        %1170 = vmatprep.subr.mxu0 0.0
        %1171 = vmatpush1.msra.mxu0 0.0
        %1172 = vmatprep.subr.mxu0 0.0
        %1173 = vmatpush1.msra.mxu0 0.0
        %1174 = vmatprep.subr.mxu0 0.0
        %1175 = vmatpush1.msra.mxu0 0.0
        %1176 = vmatprep.subr.mxu0 0.0
        %1177 = vmatpush1.msra.mxu0 0.0
        %1178 = vmatprep.subr.mxu0 0.0
        %1179 = vmatpush1.msra.mxu0 0.0
        %1180 = vmatprep.subr.mxu0 0.0
        %1181 = vmatpush1.msra.mxu0 0.0
        %1182 = vmatprep.subr.mxu0 0.0
        %1183 = vmatpush1.msra.mxu0 0.0
        %1184 = vmatprep.subr.mxu0 0.0
        %1185 = vmatpush1.msra.mxu0 0.0
        %1186 = vmatprep.subr.mxu0 0.0
        %1187 = vmatpush1.msra.mxu0 0.0
        %1188 = vmatprep.subr.mxu0 0.0
        %1189 = vmatpush1.msra.mxu0 0.0
        %1190 = vmatprep.subr.mxu0 0.0
        %1191 = vmatpush1.msra.mxu0 0.0
        %1192 = vmatprep.subr.mxu0 0.0
        %1193 = vmatpush1.msra.mxu0 0.0
        %1194 = vmatprep.subr.mxu0 0.0
        %1195 = vmatpush1.msra.mxu0 0.0
        %1196 = vmatprep.subr.mxu0 0.0
        %1197 = vmatpush1.msra.mxu0 0.0
        %1198 = vmatprep.subr.mxu0 0.0
        %1199 = vmatpush1.msra.mxu0 0.0
        %1200 = vmatprep.subr.mxu0 0.0
        %1201 = vmatpush1.msra.mxu0 0.0
        %1202 = vmatprep.subr.mxu0 0.0
        %1203 = vmatpush1.msra.mxu0 0.0
        %1204 = vmatprep.subr.mxu0 0.0
        %1205 = vmatpush1.msra.mxu0 0.0
        %1206 = vmatprep.mubr.f32.mxu0 0.0
        %1207 = vmatmul.mubr.f32.gmra.mrb[0].mxu0 %v1137
        %v1208 = vpop.f32.mrb[0].mxu0
        %v1209 = vadd.f32 0.0, %v1208
        %v1210 = vpop.f32.mrb[0].mxu0
        %1211 = vmatprep.mubr.f32.mxu0 0.0
        %1212 = vmatmul.mubr.f32.gmra.mrb[0].mxu0 %v1140
        %v1213 = vpop.f32.mrb[0].mxu0
        %v1214 = vadd.f32 0.0, %v1213
        %v1215 = vpop.f32.mrb[0].mxu0
        %1216 = vdwg.mxu0
        %1217 = vst.msk [vmem:[%s325] sm:$0xff] %vm1135, %v1209
        %1218 = vst.msk [vmem:[%s325 + $0x8] sm:$0xff] %vm1135, %v1214
        %s1219 = sand.u32 %s148, 1
        %s1220 = scalar_lea.sflag [#allocation4], %s1219
        %s1221 = sand.u32 %s148, 1
        %s1222 = smul.addr %s1221, 16
        %s1223 = scalar_lea.vmem [#allocation10], %s1222
        // Predicated region
        $region53: #{linformer_attention_forward.5} parent=35 // pred_check
          %p1224 = pneg %p158
        $region54: #{linformer_attention_forward.5} parent=35 // pred_check_branch
          %1226 = sbr.rel (%p1224) target = $region56
        $region55: #{linformer_attention_forward.5} parent=35 // pred_region
          %s1227 = smul.u32 2, %s30
          %s1229 = ssub.s32 256, 256
          %1230 = vsyncadd %s1220, %s1229
          %s1231 = smul.addr %s29, 2
          %s1232 = sadd.s32 %s1227, %s1231
          %s1233 = smul.addr %s1232, 128
          %s1234 = scalar_lea.hbm %s4, %s1233
          %s1235 = sshll.u32 %s1223, 4
          %s1236 = int_to_ptr.vmem [resolvable:$true] %s1235
          %1241 = dma.vmem_to_hbm [thread:$0]  %s1236, 256, %s1234, %s1220, 128, 128, 8
        $region56: #{linformer_attention_forward.5} parent=35 // pred_fallthru
          _
      $region36: #{linformer_attention_forward.5} parent=5 // pred_fallthru
        _
      %p1242 = scmp.le.s32.totalorder 2, %s20
      // Predicated region
      $region57: #{linformer_attention_forward.5} parent=5 // pred_check
        %p1243 = pneg %p1242
      $region58: #{linformer_attention_forward.5} parent=5 // pred_check_branch
        %1245 = sbr.rel (%p1243) target = $region60
      $region59: #{linformer_attention_forward.5} parent=5 // pred_region
        %s1246 = ssub.s32 %s20, 2
        // Predicated region
        $region61: #{linformer_attention_forward.5} parent=59 // pred_check
          %p1247 = pneg %p164
        $region62: #{linformer_attention_forward.5} parent=59 // pred_check_branch
          %1249 = sbr.rel (%p1247) target = $region64
        $region63: #{linformer_attention_forward.5} parent=59 // pred_region
          %s1250 = sand.u32 %s149, 1
          %s1251 = scalar_lea.sflag [#allocation4], %s1250
          %s1252 = sand.u32 %s149, 1
          %s1253 = smul.addr %s1252, 16
          %s1254 = scalar_lea.vmem [#allocation10], %s1253
          %1255 = dma.done %s1251, 256
        $region64: #{linformer_attention_forward.5} parent=59 // pred_fallthru
          _
      $region60: #{linformer_attention_forward.5} parent=5 // pred_fallthru
        _
    $region6: #{linformer_attention_forward.5} parent=1 // loop_footer
      %s24 = sadd.s32 1, %s20
    $region7: #{linformer_attention_forward.5} parent=1 // loop_footer_branch
      %19 = sbr.rel target = $region3
    $region8: #{linformer_attention_forward.5} parent=1 // loop_exit
      _
    %1256 = vsyncpa [#allocation3], 1
    %s1257 = scalar_lea.sflag [#allocation3], 1
    %1258 = vsyncpa %s1257, 1
    %1259 = vsyncpa [#allocation6], 1
    %s1260 = scalar_lea.sflag [#allocation6], 1
    %1261 = vsyncpa %s1260, 1
    %1262 = vsyncpa [#allocation9], 1
    %1263 = vsyncpa [#allocation4], 1
    %s1264 = scalar_lea.sflag [#allocation4], 1
    %1265 = vsyncpa %s1264, 1

</llo_original>
